<compile_context>
chip_gen: v6e
topology: v6e:2x2x1
jax: 0.10.0
libtpu: 0.0.40
codegen_flags: <defaults>
</compile_context>

<pallas_src>
import functools

import jax
import jax.numpy as jnp
from jax import lax
from jax.experimental import pallas as pl
from jax.experimental.pallas import tpu as pltpu

LANE = 128


def _round_up(x, m):
    return (x + m - 1) // m * m


# ----------------------------------------------------------------------------
# Fused kernel: stacked LSTM layers + FC head
# ----------------------------------------------------------------------------
def _fused_lstm_fc_kernel(num_layers, hidden_size, *refs):
    """refs = (x_ref,
               [w_ih_ref, w_hh_ref, b_ref] * num_layers,
               w_fc_ref, b_fc_ref,
               o_ref,
               xg_sc, hseq_sc)

    x_ref   : (T, B, Din)     time-major input (transposed in the wrapper)
    w_ih    : (Din|H, 4H)     pre-transposed input->gates weights
    w_hh    : (H, 4H)         pre-transposed hidden->gates weights
    b       : (1, 4H)         combined bias (b_ih + b_hh)
    w_fc    : (H, Cpad)       pre-transposed, lane-padded FC weight
    b_fc    : (1, Cpad)
    o_ref   : (B, Cpad)       lane-dense output
    xg_sc   : (T, B, 4H) f32  per-layer input-projection buffer (time-major)
    hseq_sc : (T, B, H) bf16  inter-layer hidden-sequence buffer (time-major)
    """
    H = hidden_size
    x_ref = refs[0]
    layer_refs = refs[1:1 + 3 * num_layers]
    w_fc_ref, b_fc_ref = refs[1 + 3 * num_layers:3 + 3 * num_layers]
    o_ref = refs[3 + 3 * num_layers]
    xg_sc, hseq_sc = refs[4 + 3 * num_layers:]

    T, B, _ = x_ref.shape
    h_last = None

    for layer in range(num_layers):
        w_ih_ref, w_hh_ref, b_ref = layer_refs[3 * layer:3 * layer + 3]
        last_layer = layer == num_layers - 1

        # Layer input, time-major, bf16 for the MXU.
        if layer == 0:
            seq = x_ref[...].astype(jnp.bfloat16)          # (T, B, Din)
        else:
            seq = hseq_sc[...]                             # (T, B, H) bf16

        Tl, Bl, Dl = seq.shape

        # Hoisted input projection: one big bf16 matmul, f32 accumulate,
        # combined bias folded in once over the whole (T*B, 4H) slab.
        xg_sc[...] = jnp.dot(
            seq.reshape(Tl * Bl, Dl),
            w_ih_ref[...].astype(jnp.bfloat16),
            preferred_element_type=jnp.float32,
        ).reshape(Tl, Bl, 4 * H) + b_ref[...]

        w_hh_b = w_hh_ref[...].astype(jnp.bfloat16)        # hoisted cast

        def step(t, carry, _last=last_layer, _w_hh=w_hh_b):
            h, c = carry                                   # (B, H) f32 in vregs
            gates = xg_sc[t] + jnp.dot(
                h.astype(jnp.bfloat16), _w_hh,
                preferred_element_type=jnp.float32)        # (B, 4H) f32
            # One full-width sigmoid (all 4H lanes) + one H-wide tanh.
            sig = jax.nn.sigmoid(gates)
            g = jnp.tanh(gates[:, 2 * H:3 * H])
            i = sig[:, 0 * H:1 * H]
            f = sig[:, 1 * H:2 * H]
            o = sig[:, 3 * H:4 * H]
            c_new = f * c + i * g
            h_new = o * jnp.tanh(c_new)
            if not _last:                                  # last layer only needs h_T
                hseq_sc[t] = h_new.astype(hseq_sc.dtype)
            return h_new, c_new

        zeros = jnp.zeros((Bl, H), jnp.float32)
        # Short fixed trip-count: unroll so the scheduler can overlap the
        # per-step store / VPU / EUP work with the next step's setup.
        h_last, _ = lax.fori_loop(0, T, step, (zeros, zeros), unroll=True)

    # Fused FC head on the last hidden state; lane-padded output width.
    o_ref[...] = (
        jnp.dot(h_last, w_fc_ref[...], preferred_element_type=jnp.float32)
        + b_fc_ref[...]
    ).astype(o_ref.dtype)


# ----------------------------------------------------------------------------
# Wrapper
# ----------------------------------------------------------------------------
@functools.partial(
    jax.jit, static_argnames=("num_layers", "hidden_size", "num_classes"))
def lstm_model_forward(x, params, num_layers, hidden_size, num_classes):
    """Equivalent of LSTM.forward: stacked LSTM -> last timestep -> Linear."""
    B, T, Din = x.shape
    H = hidden_size
    c_pad = params["fc"][0].shape[1]

    # Time-major layout plumbing in the wrapper (cheap XLA transpose) so the
    # kernel only does contiguous leading-axis indexing.
    x_tm = jnp.transpose(x, (1, 0, 2))                     # (T, B, Din)

    # Batch tile: whole batch if small / not a multiple of 8, else tiles of 8
    # so the "parallel" grid axis can shard batch across TensorCores (v7x).
    bt = 8 if (B > 8 and B % 8 == 0) else B
    grid = (B // bt,)

    vmem_full = pl.BlockSpec(memory_space=pltpu.MemorySpace.VMEM)

    flat_args = [x_tm]
    in_specs = [pl.BlockSpec((T, bt, Din), lambda i: (0, i, 0))]
    for layer in range(num_layers):
        w_ih_t, w_hh_t, b = params[f"l{layer}"]
        flat_args += [w_ih_t, w_hh_t, b]
        in_specs += [vmem_full, vmem_full, vmem_full]
    w_fc_t, b_fc = params["fc"]
    flat_args += [w_fc_t, b_fc]
    in_specs += [vmem_full, vmem_full]

    kernel = functools.partial(_fused_lstm_fc_kernel, num_layers, H)

    out_pad = pl.pallas_call(
        kernel,
        out_shape=jax.ShapeDtypeStruct((B, c_pad), jnp.float32),
        grid=grid,
        in_specs=in_specs,
        out_specs=pl.BlockSpec((bt, c_pad), lambda i: (i, 0)),
        scratch_shapes=[
            pltpu.VMEM((T, bt, 4 * H), jnp.float32),   # xg buffer (time-major)
            pltpu.VMEM((T, bt, H), jnp.bfloat16),      # inter-layer h sequence
        ],
        compiler_params=pltpu.CompilerParams(
            dimension_semantics=("parallel",),
            vmem_limit_bytes=48 * 1024 * 1024,
        ),
    )(*flat_args)

    return out_pad[:, :num_classes]


# ----------------------------------------------------------------------------
# Deterministic parameter construction (PyTorch-style uniform init)
# ----------------------------------------------------------------------------
def init_params(key, input_size, hidden_size, num_layers, num_classes):
    params = {}
    k = 1.0 / jnp.sqrt(hidden_size)
    keys = jax.random.split(key, num_layers * 4 + 2)
    ki = 0
    for layer in range(num_layers):
        din = input_size if layer == 0 else hidden_size
        w_ih = jax.random.uniform(keys[ki], (4 * hidden_size, din), jnp.float32, -k, k); ki += 1
        w_hh = jax.random.uniform(keys[ki], (4 * hidden_size, hidden_size), jnp.float32, -k, k); ki += 1
        b_ih = jax.random.uniform(keys[ki], (4 * hidden_size,), jnp.float32, -k, k); ki += 1
        b_hh = jax.random.uniform(keys[ki], (4 * hidden_size,), jnp.float32, -k, k); ki += 1
        # Pre-transpose for row-major matmuls; combine the two biases.
        params[f"l{layer}"] = (w_ih.T, w_hh.T, (b_ih + b_hh)[None, :])
    w_fc = jax.random.uniform(keys[ki], (num_classes, hidden_size), jnp.float32, -k, k); ki += 1
    b_fc = jax.random.uniform(keys[ki], (num_classes,), jnp.float32, -k, k); ki += 1
    # Lane-pad the FC head to a multiple of 128 so the kernel's single output
    # store is lane-dense; the wrapper slices the padding off.
    c_pad = _round_up(num_classes, LANE)
    w_fc_pad = jnp.zeros((hidden_size, c_pad), jnp.float32).at[:, :num_classes].set(w_fc.T)
    b_fc_pad = jnp.zeros((1, c_pad), jnp.float32).at[:, :num_classes].set(b_fc)
    params["fc"] = (w_fc_pad, b_fc_pad)
    return params


if __name__ == "__main__":
    # Module hyper-params (small, consistent with the forward pass).
    input_size = 4
    hidden_size = 32
    num_layers = 2
    batch_size = 2
    seq_len = 8
    num_classes = 5
    # dropout = 0.0 (inference-mode forward)

    root = jax.random.PRNGKey(0)
    kx, kp = jax.random.split(root)
    x = jax.random.normal(kx, (batch_size, seq_len, input_size), jnp.float32)
    params = init_params(kp, input_size, hidden_size, num_layers, num_classes)

    out = lstm_model_forward(x, params, num_layers, hidden_size, num_classes)
    out = jax.block_until_ready(out)
    assert out.shape == (batch_size, num_classes)
    assert bool(jnp.all(jnp.isfinite(out)))
    print("KERNEL_OK")
</pallas_src>

<mosaic_0001>
module attributes {stable_mosaic.version = 11 : i64} {
  func.func @_fused_lstm_fc_kernel(%arg0: i32, %arg1: memref<8x2x4xf32, #tpu.memory_space<vmem>>, %arg2: memref<4x128xf32, #tpu.memory_space<vmem>>, %arg3: memref<32x128xf32, #tpu.memory_space<vmem>>, %arg4: memref<1x128xf32, #tpu.memory_space<vmem>>, %arg5: memref<32x128xf32, #tpu.memory_space<vmem>>, %arg6: memref<32x128xf32, #tpu.memory_space<vmem>>, %arg7: memref<1x128xf32, #tpu.memory_space<vmem>>, %arg8: memref<32x128xf32, #tpu.memory_space<vmem>>, %arg9: memref<1x128xf32, #tpu.memory_space<vmem>>, %arg10: memref<2x128xf32, #tpu.memory_space<vmem>>, %arg11: memref<8x2x128xf32, #tpu.memory_space<vmem>>, %arg12: memref<8x2x32xbf16, #tpu.memory_space<vmem>>) attributes {dimension_semantics = [#tpu.dimension_semantics<parallel>], iteration_bounds = array<i64: 1>, scalar_prefetch = 0 : i64, scratch_operands = 2 : i64, tpu.core_type = #tpu.core_type<tc>, window_params = [{transform_indices = @transform_0, window_bounds = array<i64: 8, 2, 4>}, {pipeline_mode = #tpu.pipeline_mode<synchronous>, transform_indices = @transform_1, window_bounds = array<i64: 4, 128>}, {pipeline_mode = #tpu.pipeline_mode<synchronous>, transform_indices = @transform_2, window_bounds = array<i64: 32, 128>}, {pipeline_mode = #tpu.pipeline_mode<synchronous>, transform_indices = @transform_3, window_bounds = array<i64: 1, 128>}, {pipeline_mode = #tpu.pipeline_mode<synchronous>, transform_indices = @transform_4, window_bounds = array<i64: 32, 128>}, {pipeline_mode = #tpu.pipeline_mode<synchronous>, transform_indices = @transform_5, window_bounds = array<i64: 32, 128>}, {pipeline_mode = #tpu.pipeline_mode<synchronous>, transform_indices = @transform_6, window_bounds = array<i64: 1, 128>}, {pipeline_mode = #tpu.pipeline_mode<synchronous>, transform_indices = @transform_7, window_bounds = array<i64: 32, 128>}, {pipeline_mode = #tpu.pipeline_mode<synchronous>, transform_indices = @transform_8, window_bounds = array<i64: 1, 128>}, {transform_indices = @transform_9, window_bounds = array<i64: 2, 128>}]} {
    %c0 = arith.constant 0 : index
    %c0_0 = arith.constant 0 : index
    %c0_1 = arith.constant 0 : index
    %0 = vector.load %arg1[%c0, %c0_0, %c0_1] : memref<8x2x4xf32, #tpu.memory_space<vmem>>, vector<8x2x4xf32>
    %1 = arith.truncf %0 : vector<8x2x4xf32> to vector<8x2x4xbf16>
    %2 = vector.shape_cast %1 : vector<8x2x4xbf16> to vector<16x4xbf16>
    %c0_2 = arith.constant 0 : index
    %c0_3 = arith.constant 0 : index
    %3 = vector.load %arg2[%c0_2, %c0_3] : memref<4x128xf32, #tpu.memory_space<vmem>>, vector<4x128xf32>
    %4 = arith.truncf %3 : vector<4x128xf32> to vector<4x128xbf16>
    %cst = arith.constant dense<0.000000e+00> : vector<16x128xf32>
    %5 = tpu.matmul %2, %4, %cst {dimension_numbers = #tpu.dot_dimension_numbers<[1], [0], [0], [1], [0, 0, 1, 1], [], []>} : vector<16x4xbf16>, vector<4x128xbf16>, vector<16x128xf32> -> vector<16x128xf32>
    %6 = vector.shape_cast %5 : vector<16x128xf32> to vector<8x2x128xf32>
    %c0_4 = arith.constant 0 : index
    %c0_5 = arith.constant 0 : index
    %7 = vector.load %arg4[%c0_4, %c0_5] : memref<1x128xf32, #tpu.memory_space<vmem>>, vector<1x128xf32>
    %8 = vector.shape_cast %7 : vector<1x128xf32> to vector<1x1x128xf32>
    %9 = vector.broadcast %8 : vector<1x1x128xf32> to vector<8x2x128xf32>
    %10 = arith.addf %6, %9 : vector<8x2x128xf32>
    %c0_6 = arith.constant 0 : index
    %c0_7 = arith.constant 0 : index
    %c0_8 = arith.constant 0 : index
    %11 = vector.load %arg11[%c0_6, %c0_7, %c0_8] : memref<8x2x128xf32, #tpu.memory_space<vmem>>, vector<8x2x128xf32>
    tpu.vector_store %arg11[%c0_6, %c0_7, %c0_8], %10 {strides = array<i32>} : memref<8x2x128xf32, #tpu.memory_space<vmem>>, vector<8x2x128xf32>,
    %c0_9 = arith.constant 0 : index
    %c0_10 = arith.constant 0 : index
    %12 = vector.load %arg3[%c0_9, %c0_10] : memref<32x128xf32, #tpu.memory_space<vmem>>, vector<32x128xf32>
    %13 = arith.truncf %12 : vector<32x128xf32> to vector<32x128xbf16>
    %cst_11 = arith.constant 0.000000e+00 : f32
    %14 = vector.broadcast %cst_11 : f32 to vector<2x32xf32>
    %c0_i32 = arith.constant 0 : i32
    %15 = arith.index_cast %c0_i32 : i32 to index
    %c0_12 = arith.constant 0 : index
    %c0_13 = arith.constant 0 : index
    %16 = vector.load %arg11[%15, %c0_12, %c0_13] : memref<8x2x128xf32, #tpu.memory_space<vmem>>, vector<1x2x128xf32>
    %17 = vector.shape_cast %16 : vector<1x2x128xf32> to vector<2x128xf32>
    %18 = arith.truncf %14 : vector<2x32xf32> to vector<2x32xbf16>
    %cst_14 = arith.constant dense<0.000000e+00> : vector<2x128xf32>
    %19 = tpu.matmul %18, %13, %cst_14 {dimension_numbers = #tpu.dot_dimension_numbers<[1], [0], [0], [1], [0, 0, 1, 1], [], []>} : vector<2x32xbf16>, vector<32x128xbf16>, vector<2x128xf32> -> vector<2x128xf32>
    %20 = arith.addf %17, %19 : vector<2x128xf32>
    %21 = arith.negf %20 : vector<2x128xf32>
    %22 = math.exp %21 : vector<2x128xf32>
    %cst_15 = arith.constant 1.000000e+00 : f32
    %23 = vector.broadcast %cst_15 : f32 to vector<2x128xf32>
    %24 = arith.addf %23, %22 : vector<2x128xf32>
    %25 = arith.divf %23, %24 : vector<2x128xf32>
    %26 = vector.extract_strided_slice %20 {offsets = [0, 64], sizes = [2, 32], strides = [1, 1]} : vector<2x128xf32> to vector<2x32xf32>
    %27 = math.tanh %26 : vector<2x32xf32>
    %28 = vector.extract_strided_slice %25 {offsets = [0, 0], sizes = [2, 32], strides = [1, 1]} : vector<2x128xf32> to vector<2x32xf32>
    %29 = vector.extract_strided_slice %25 {offsets = [0, 32], sizes = [2, 32], strides = [1, 1]} : vector<2x128xf32> to vector<2x32xf32>
    %30 = vector.extract_strided_slice %25 {offsets = [0, 96], sizes = [2, 32], strides = [1, 1]} : vector<2x128xf32> to vector<2x32xf32>
    %31 = arith.mulf %29, %14 : vector<2x32xf32>
    %32 = arith.mulf %28, %27 : vector<2x32xf32>
    %33 = arith.addf %31, %32 : vector<2x32xf32>
    %34 = math.tanh %33 : vector<2x32xf32>
    %35 = arith.mulf %30, %34 : vector<2x32xf32>
    %36 = arith.truncf %35 : vector<2x32xf32> to vector<2x32xbf16>
    %37 = arith.index_cast %c0_i32 : i32 to index
    %c0_16 = arith.constant 0 : index
    %c0_17 = arith.constant 0 : index
    %38 = vector.load %arg12[%37, %c0_16, %c0_17] : memref<8x2x32xbf16, #tpu.memory_space<vmem>>, vector<1x2x32xbf16>
    %39 = vector.shape_cast %38 : vector<1x2x32xbf16> to vector<2x32xbf16>
    %40 = vector.shape_cast %36 : vector<2x32xbf16> to vector<1x2x32xbf16>
    tpu.vector_store %arg12[%37, %c0_16, %c0_17], %40 {strides = array<i32>} : memref<8x2x32xbf16, #tpu.memory_space<vmem>>, vector<1x2x32xbf16>,
    %c1_i32 = arith.constant 1 : i32
    %41 = arith.index_cast %c1_i32 : i32 to index
    %c0_18 = arith.constant 0 : index
    %c0_19 = arith.constant 0 : index
    %42 = vector.load %arg11[%41, %c0_18, %c0_19] : memref<8x2x128xf32, #tpu.memory_space<vmem>>, vector<1x2x128xf32>
    %43 = vector.shape_cast %42 : vector<1x2x128xf32> to vector<2x128xf32>
    %44 = arith.truncf %35 : vector<2x32xf32> to vector<2x32xbf16>
    %cst_20 = arith.constant dense<0.000000e+00> : vector<2x128xf32>
    %45 = tpu.matmul %44, %13, %cst_20 {dimension_numbers = #tpu.dot_dimension_numbers<[1], [0], [0], [1], [0, 0, 1, 1], [], []>} : vector<2x32xbf16>, vector<32x128xbf16>, vector<2x128xf32> -> vector<2x128xf32>
    %46 = arith.addf %43, %45 : vector<2x128xf32>
    %47 = arith.negf %46 : vector<2x128xf32>
    %48 = math.exp %47 : vector<2x128xf32>
    %cst_21 = arith.constant 1.000000e+00 : f32
    %49 = vector.broadcast %cst_21 : f32 to vector<2x128xf32>
    %50 = arith.addf %49, %48 : vector<2x128xf32>
    %51 = arith.divf %49, %50 : vector<2x128xf32>
    %52 = vector.extract_strided_slice %46 {offsets = [0, 64], sizes = [2, 32], strides = [1, 1]} : vector<2x128xf32> to vector<2x32xf32>
    %53 = math.tanh %52 : vector<2x32xf32>
    %54 = vector.extract_strided_slice %51 {offsets = [0, 0], sizes = [2, 32], strides = [1, 1]} : vector<2x128xf32> to vector<2x32xf32>
    %55 = vector.extract_strided_slice %51 {offsets = [0, 32], sizes = [2, 32], strides = [1, 1]} : vector<2x128xf32> to vector<2x32xf32>
    %56 = vector.extract_strided_slice %51 {offsets = [0, 96], sizes = [2, 32], strides = [1, 1]} : vector<2x128xf32> to vector<2x32xf32>
    %57 = arith.mulf %55, %33 : vector<2x32xf32>
    %58 = arith.mulf %54, %53 : vector<2x32xf32>
    %59 = arith.addf %57, %58 : vector<2x32xf32>
    %60 = math.tanh %59 : vector<2x32xf32>
    %61 = arith.mulf %56, %60 : vector<2x32xf32>
    %62 = arith.truncf %61 : vector<2x32xf32> to vector<2x32xbf16>
    %63 = arith.index_cast %c1_i32 : i32 to index
    %c0_22 = arith.constant 0 : index
    %c0_23 = arith.constant 0 : index
    %64 = vector.load %arg12[%63, %c0_22, %c0_23] : memref<8x2x32xbf16, #tpu.memory_space<vmem>>, vector<1x2x32xbf16>
    %65 = vector.shape_cast %64 : vector<1x2x32xbf16> to vector<2x32xbf16>
    %66 = vector.shape_cast %62 : vector<2x32xbf16> to vector<1x2x32xbf16>
    tpu.vector_store %arg12[%63, %c0_22, %c0_23], %66 {strides = array<i32>} : memref<8x2x32xbf16, #tpu.memory_space<vmem>>, vector<1x2x32xbf16>,
    %c2_i32 = arith.constant 2 : i32
    %67 = arith.index_cast %c2_i32 : i32 to index
    %c0_24 = arith.constant 0 : index
    %c0_25 = arith.constant 0 : index
    %68 = vector.load %arg11[%67, %c0_24, %c0_25] : memref<8x2x128xf32, #tpu.memory_space<vmem>>, vector<1x2x128xf32>
    %69 = vector.shape_cast %68 : vector<1x2x128xf32> to vector<2x128xf32>
    %70 = arith.truncf %61 : vector<2x32xf32> to vector<2x32xbf16>
    %cst_26 = arith.constant dense<0.000000e+00> : vector<2x128xf32>
    %71 = tpu.matmul %70, %13, %cst_26 {dimension_numbers = #tpu.dot_dimension_numbers<[1], [0], [0], [1], [0, 0, 1, 1], [], []>} : vector<2x32xbf16>, vector<32x128xbf16>, vector<2x128xf32> -> vector<2x128xf32>
    %72 = arith.addf %69, %71 : vector<2x128xf32>
    %73 = arith.negf %72 : vector<2x128xf32>
    %74 = math.exp %73 : vector<2x128xf32>
    %cst_27 = arith.constant 1.000000e+00 : f32
    %75 = vector.broadcast %cst_27 : f32 to vector<2x128xf32>
    %76 = arith.addf %75, %74 : vector<2x128xf32>
    %77 = arith.divf %75, %76 : vector<2x128xf32>
    %78 = vector.extract_strided_slice %72 {offsets = [0, 64], sizes = [2, 32], strides = [1, 1]} : vector<2x128xf32> to vector<2x32xf32>
    %79 = math.tanh %78 : vector<2x32xf32>
    %80 = vector.extract_strided_slice %77 {offsets = [0, 0], sizes = [2, 32], strides = [1, 1]} : vector<2x128xf32> to vector<2x32xf32>
    %81 = vector.extract_strided_slice %77 {offsets = [0, 32], sizes = [2, 32], strides = [1, 1]} : vector<2x128xf32> to vector<2x32xf32>
    %82 = vector.extract_strided_slice %77 {offsets = [0, 96], sizes = [2, 32], strides = [1, 1]} : vector<2x128xf32> to vector<2x32xf32>
    %83 = arith.mulf %81, %59 : vector<2x32xf32>
    %84 = arith.mulf %80, %79 : vector<2x32xf32>
    %85 = arith.addf %83, %84 : vector<2x32xf32>
    %86 = math.tanh %85 : vector<2x32xf32>
    %87 = arith.mulf %82, %86 : vector<2x32xf32>
    %88 = arith.truncf %87 : vector<2x32xf32> to vector<2x32xbf16>
    %89 = arith.index_cast %c2_i32 : i32 to index
    %c0_28 = arith.constant 0 : index
    %c0_29 = arith.constant 0 : index
    %90 = vector.load %arg12[%89, %c0_28, %c0_29] : memref<8x2x32xbf16, #tpu.memory_space<vmem>>, vector<1x2x32xbf16>
    %91 = vector.shape_cast %90 : vector<1x2x32xbf16> to vector<2x32xbf16>
    %92 = vector.shape_cast %88 : vector<2x32xbf16> to vector<1x2x32xbf16>
    tpu.vector_store %arg12[%89, %c0_28, %c0_29], %92 {strides = array<i32>} : memref<8x2x32xbf16, #tpu.memory_space<vmem>>, vector<1x2x32xbf16>,
    %c3_i32 = arith.constant 3 : i32
    %93 = arith.index_cast %c3_i32 : i32 to index
    %c0_30 = arith.constant 0 : index
    %c0_31 = arith.constant 0 : index
    %94 = vector.load %arg11[%93, %c0_30, %c0_31] : memref<8x2x128xf32, #tpu.memory_space<vmem>>, vector<1x2x128xf32>
    %95 = vector.shape_cast %94 : vector<1x2x128xf32> to vector<2x128xf32>
    %96 = arith.truncf %87 : vector<2x32xf32> to vector<2x32xbf16>
    %cst_32 = arith.constant dense<0.000000e+00> : vector<2x128xf32>
    %97 = tpu.matmul %96, %13, %cst_32 {dimension_numbers = #tpu.dot_dimension_numbers<[1], [0], [0], [1], [0, 0, 1, 1], [], []>} : vector<2x32xbf16>, vector<32x128xbf16>, vector<2x128xf32> -> vector<2x128xf32>
    %98 = arith.addf %95, %97 : vector<2x128xf32>
    %99 = arith.negf %98 : vector<2x128xf32>
    %100 = math.exp %99 : vector<2x128xf32>
    %cst_33 = arith.constant 1.000000e+00 : f32
    %101 = vector.broadcast %cst_33 : f32 to vector<2x128xf32>
    %102 = arith.addf %101, %100 : vector<2x128xf32>
    %103 = arith.divf %101, %102 : vector<2x128xf32>
    %104 = vector.extract_strided_slice %98 {offsets = [0, 64], sizes = [2, 32], strides = [1, 1]} : vector<2x128xf32> to vector<2x32xf32>
    %105 = math.tanh %104 : vector<2x32xf32>
    %106 = vector.extract_strided_slice %103 {offsets = [0, 0], sizes = [2, 32], strides = [1, 1]} : vector<2x128xf32> to vector<2x32xf32>
    %107 = vector.extract_strided_slice %103 {offsets = [0, 32], sizes = [2, 32], strides = [1, 1]} : vector<2x128xf32> to vector<2x32xf32>
    %108 = vector.extract_strided_slice %103 {offsets = [0, 96], sizes = [2, 32], strides = [1, 1]} : vector<2x128xf32> to vector<2x32xf32>
    %109 = arith.mulf %107, %85 : vector<2x32xf32>
    %110 = arith.mulf %106, %105 : vector<2x32xf32>
    %111 = arith.addf %109, %110 : vector<2x32xf32>
    %112 = math.tanh %111 : vector<2x32xf32>
    %113 = arith.mulf %108, %112 : vector<2x32xf32>
    %114 = arith.truncf %113 : vector<2x32xf32> to vector<2x32xbf16>
    %115 = arith.index_cast %c3_i32 : i32 to index
    %c0_34 = arith.constant 0 : index
    %c0_35 = arith.constant 0 : index
    %116 = vector.load %arg12[%115, %c0_34, %c0_35] : memref<8x2x32xbf16, #tpu.memory_space<vmem>>, vector<1x2x32xbf16>
    %117 = vector.shape_cast %116 : vector<1x2x32xbf16> to vector<2x32xbf16>
    %118 = vector.shape_cast %114 : vector<2x32xbf16> to vector<1x2x32xbf16>
    tpu.vector_store %arg12[%115, %c0_34, %c0_35], %118 {strides = array<i32>} : memref<8x2x32xbf16, #tpu.memory_space<vmem>>, vector<1x2x32xbf16>,
    %c4_i32 = arith.constant 4 : i32
    %119 = arith.index_cast %c4_i32 : i32 to index
    %c0_36 = arith.constant 0 : index
    %c0_37 = arith.constant 0 : index
    %120 = vector.load %arg11[%119, %c0_36, %c0_37] : memref<8x2x128xf32, #tpu.memory_space<vmem>>, vector<1x2x128xf32>
    %121 = vector.shape_cast %120 : vector<1x2x128xf32> to vector<2x128xf32>
    %122 = arith.truncf %113 : vector<2x32xf32> to vector<2x32xbf16>
    %cst_38 = arith.constant dense<0.000000e+00> : vector<2x128xf32>
    %123 = tpu.matmul %122, %13, %cst_38 {dimension_numbers = #tpu.dot_dimension_numbers<[1], [0], [0], [1], [0, 0, 1, 1], [], []>} : vector<2x32xbf16>, vector<32x128xbf16>, vector<2x128xf32> -> vector<2x128xf32>
    %124 = arith.addf %121, %123 : vector<2x128xf32>
    %125 = arith.negf %124 : vector<2x128xf32>
    %126 = math.exp %125 : vector<2x128xf32>
    %cst_39 = arith.constant 1.000000e+00 : f32
    %127 = vector.broadcast %cst_39 : f32 to vector<2x128xf32>
    %128 = arith.addf %127, %126 : vector<2x128xf32>
    %129 = arith.divf %127, %128 : vector<2x128xf32>
    %130 = vector.extract_strided_slice %124 {offsets = [0, 64], sizes = [2, 32], strides = [1, 1]} : vector<2x128xf32> to vector<2x32xf32>
    %131 = math.tanh %130 : vector<2x32xf32>
    %132 = vector.extract_strided_slice %129 {offsets = [0, 0], sizes = [2, 32], strides = [1, 1]} : vector<2x128xf32> to vector<2x32xf32>
    %133 = vector.extract_strided_slice %129 {offsets = [0, 32], sizes = [2, 32], strides = [1, 1]} : vector<2x128xf32> to vector<2x32xf32>
    %134 = vector.extract_strided_slice %129 {offsets = [0, 96], sizes = [2, 32], strides = [1, 1]} : vector<2x128xf32> to vector<2x32xf32>
    %135 = arith.mulf %133, %111 : vector<2x32xf32>
    %136 = arith.mulf %132, %131 : vector<2x32xf32>
    %137 = arith.addf %135, %136 : vector<2x32xf32>
    %138 = math.tanh %137 : vector<2x32xf32>
    %139 = arith.mulf %134, %138 : vector<2x32xf32>
    %140 = arith.truncf %139 : vector<2x32xf32> to vector<2x32xbf16>
    %141 = arith.index_cast %c4_i32 : i32 to index
    %c0_40 = arith.constant 0 : index
    %c0_41 = arith.constant 0 : index
    %142 = vector.load %arg12[%141, %c0_40, %c0_41] : memref<8x2x32xbf16, #tpu.memory_space<vmem>>, vector<1x2x32xbf16>
    %143 = vector.shape_cast %142 : vector<1x2x32xbf16> to vector<2x32xbf16>
    %144 = vector.shape_cast %140 : vector<2x32xbf16> to vector<1x2x32xbf16>
    tpu.vector_store %arg12[%141, %c0_40, %c0_41], %144 {strides = array<i32>} : memref<8x2x32xbf16, #tpu.memory_space<vmem>>, vector<1x2x32xbf16>,
    %c5_i32 = arith.constant 5 : i32
    %145 = arith.index_cast %c5_i32 : i32 to index
    %c0_42 = arith.constant 0 : index
    %c0_43 = arith.constant 0 : index
    %146 = vector.load %arg11[%145, %c0_42, %c0_43] : memref<8x2x128xf32, #tpu.memory_space<vmem>>, vector<1x2x128xf32>
    %147 = vector.shape_cast %146 : vector<1x2x128xf32> to vector<2x128xf32>
    %148 = arith.truncf %139 : vector<2x32xf32> to vector<2x32xbf16>
    %cst_44 = arith.constant dense<0.000000e+00> : vector<2x128xf32>
    %149 = tpu.matmul %148, %13, %cst_44 {dimension_numbers = #tpu.dot_dimension_numbers<[1], [0], [0], [1], [0, 0, 1, 1], [], []>} : vector<2x32xbf16>, vector<32x128xbf16>, vector<2x128xf32> -> vector<2x128xf32>
    %150 = arith.addf %147, %149 : vector<2x128xf32>
    %151 = arith.negf %150 : vector<2x128xf32>
    %152 = math.exp %151 : vector<2x128xf32>
    %cst_45 = arith.constant 1.000000e+00 : f32
    %153 = vector.broadcast %cst_45 : f32 to vector<2x128xf32>
    %154 = arith.addf %153, %152 : vector<2x128xf32>
    %155 = arith.divf %153, %154 : vector<2x128xf32>
    %156 = vector.extract_strided_slice %150 {offsets = [0, 64], sizes = [2, 32], strides = [1, 1]} : vector<2x128xf32> to vector<2x32xf32>
    %157 = math.tanh %156 : vector<2x32xf32>
    %158 = vector.extract_strided_slice %155 {offsets = [0, 0], sizes = [2, 32], strides = [1, 1]} : vector<2x128xf32> to vector<2x32xf32>
    %159 = vector.extract_strided_slice %155 {offsets = [0, 32], sizes = [2, 32], strides = [1, 1]} : vector<2x128xf32> to vector<2x32xf32>
    %160 = vector.extract_strided_slice %155 {offsets = [0, 96], sizes = [2, 32], strides = [1, 1]} : vector<2x128xf32> to vector<2x32xf32>
    %161 = arith.mulf %159, %137 : vector<2x32xf32>
    %162 = arith.mulf %158, %157 : vector<2x32xf32>
    %163 = arith.addf %161, %162 : vector<2x32xf32>
    %164 = math.tanh %163 : vector<2x32xf32>
    %165 = arith.mulf %160, %164 : vector<2x32xf32>
    %166 = arith.truncf %165 : vector<2x32xf32> to vector<2x32xbf16>
    %167 = arith.index_cast %c5_i32 : i32 to index
    %c0_46 = arith.constant 0 : index
    %c0_47 = arith.constant 0 : index
    %168 = vector.load %arg12[%167, %c0_46, %c0_47] : memref<8x2x32xbf16, #tpu.memory_space<vmem>>, vector<1x2x32xbf16>
    %169 = vector.shape_cast %168 : vector<1x2x32xbf16> to vector<2x32xbf16>
    %170 = vector.shape_cast %166 : vector<2x32xbf16> to vector<1x2x32xbf16>
    tpu.vector_store %arg12[%167, %c0_46, %c0_47], %170 {strides = array<i32>} : memref<8x2x32xbf16, #tpu.memory_space<vmem>>, vector<1x2x32xbf16>,
    %c6_i32 = arith.constant 6 : i32
    %171 = arith.index_cast %c6_i32 : i32 to index
    %c0_48 = arith.constant 0 : index
    %c0_49 = arith.constant 0 : index
    %172 = vector.load %arg11[%171, %c0_48, %c0_49] : memref<8x2x128xf32, #tpu.memory_space<vmem>>, vector<1x2x128xf32>
    %173 = vector.shape_cast %172 : vector<1x2x128xf32> to vector<2x128xf32>
    %174 = arith.truncf %165 : vector<2x32xf32> to vector<2x32xbf16>
    %cst_50 = arith.constant dense<0.000000e+00> : vector<2x128xf32>
    %175 = tpu.matmul %174, %13, %cst_50 {dimension_numbers = #tpu.dot_dimension_numbers<[1], [0], [0], [1], [0, 0, 1, 1], [], []>} : vector<2x32xbf16>, vector<32x128xbf16>, vector<2x128xf32> -> vector<2x128xf32>
    %176 = arith.addf %173, %175 : vector<2x128xf32>
    %177 = arith.negf %176 : vector<2x128xf32>
    %178 = math.exp %177 : vector<2x128xf32>
    %cst_51 = arith.constant 1.000000e+00 : f32
    %179 = vector.broadcast %cst_51 : f32 to vector<2x128xf32>
    %180 = arith.addf %179, %178 : vector<2x128xf32>
    %181 = arith.divf %179, %180 : vector<2x128xf32>
    %182 = vector.extract_strided_slice %176 {offsets = [0, 64], sizes = [2, 32], strides = [1, 1]} : vector<2x128xf32> to vector<2x32xf32>
    %183 = math.tanh %182 : vector<2x32xf32>
    %184 = vector.extract_strided_slice %181 {offsets = [0, 0], sizes = [2, 32], strides = [1, 1]} : vector<2x128xf32> to vector<2x32xf32>
    %185 = vector.extract_strided_slice %181 {offsets = [0, 32], sizes = [2, 32], strides = [1, 1]} : vector<2x128xf32> to vector<2x32xf32>
    %186 = vector.extract_strided_slice %181 {offsets = [0, 96], sizes = [2, 32], strides = [1, 1]} : vector<2x128xf32> to vector<2x32xf32>
    %187 = arith.mulf %185, %163 : vector<2x32xf32>
    %188 = arith.mulf %184, %183 : vector<2x32xf32>
    %189 = arith.addf %187, %188 : vector<2x32xf32>
    %190 = math.tanh %189 : vector<2x32xf32>
    %191 = arith.mulf %186, %190 : vector<2x32xf32>
    %192 = arith.truncf %191 : vector<2x32xf32> to vector<2x32xbf16>
    %193 = arith.index_cast %c6_i32 : i32 to index
    %c0_52 = arith.constant 0 : index
    %c0_53 = arith.constant 0 : index
    %194 = vector.load %arg12[%193, %c0_52, %c0_53] : memref<8x2x32xbf16, #tpu.memory_space<vmem>>, vector<1x2x32xbf16>
    %195 = vector.shape_cast %194 : vector<1x2x32xbf16> to vector<2x32xbf16>
    %196 = vector.shape_cast %192 : vector<2x32xbf16> to vector<1x2x32xbf16>
    tpu.vector_store %arg12[%193, %c0_52, %c0_53], %196 {strides = array<i32>} : memref<8x2x32xbf16, #tpu.memory_space<vmem>>, vector<1x2x32xbf16>,
    %c7_i32 = arith.constant 7 : i32
    %197 = arith.index_cast %c7_i32 : i32 to index
    %c0_54 = arith.constant 0 : index
    %c0_55 = arith.constant 0 : index
    %198 = vector.load %arg11[%197, %c0_54, %c0_55] : memref<8x2x128xf32, #tpu.memory_space<vmem>>, vector<1x2x128xf32>
    %199 = vector.shape_cast %198 : vector<1x2x128xf32> to vector<2x128xf32>
    %200 = arith.truncf %191 : vector<2x32xf32> to vector<2x32xbf16>
    %cst_56 = arith.constant dense<0.000000e+00> : vector<2x128xf32>
    %201 = tpu.matmul %200, %13, %cst_56 {dimension_numbers = #tpu.dot_dimension_numbers<[1], [0], [0], [1], [0, 0, 1, 1], [], []>} : vector<2x32xbf16>, vector<32x128xbf16>, vector<2x128xf32> -> vector<2x128xf32>
    %202 = arith.addf %199, %201 : vector<2x128xf32>
    %203 = arith.negf %202 : vector<2x128xf32>
    %204 = math.exp %203 : vector<2x128xf32>
    %cst_57 = arith.constant 1.000000e+00 : f32
    %205 = vector.broadcast %cst_57 : f32 to vector<2x128xf32>
    %206 = arith.addf %205, %204 : vector<2x128xf32>
    %207 = arith.divf %205, %206 : vector<2x128xf32>
    %208 = vector.extract_strided_slice %202 {offsets = [0, 64], sizes = [2, 32], strides = [1, 1]} : vector<2x128xf32> to vector<2x32xf32>
    %209 = math.tanh %208 : vector<2x32xf32>
    %210 = vector.extract_strided_slice %207 {offsets = [0, 0], sizes = [2, 32], strides = [1, 1]} : vector<2x128xf32> to vector<2x32xf32>
    %211 = vector.extract_strided_slice %207 {offsets = [0, 32], sizes = [2, 32], strides = [1, 1]} : vector<2x128xf32> to vector<2x32xf32>
    %212 = vector.extract_strided_slice %207 {offsets = [0, 96], sizes = [2, 32], strides = [1, 1]} : vector<2x128xf32> to vector<2x32xf32>
    %213 = arith.mulf %211, %189 : vector<2x32xf32>
    %214 = arith.mulf %210, %209 : vector<2x32xf32>
    %215 = arith.addf %213, %214 : vector<2x32xf32>
    %216 = math.tanh %215 : vector<2x32xf32>
    %217 = arith.mulf %212, %216 : vector<2x32xf32>
    %218 = arith.truncf %217 : vector<2x32xf32> to vector<2x32xbf16>
    %219 = arith.index_cast %c7_i32 : i32 to index
    %c0_58 = arith.constant 0 : index
    %c0_59 = arith.constant 0 : index
    %220 = vector.load %arg12[%219, %c0_58, %c0_59] : memref<8x2x32xbf16, #tpu.memory_space<vmem>>, vector<1x2x32xbf16>
    %221 = vector.shape_cast %220 : vector<1x2x32xbf16> to vector<2x32xbf16>
    %222 = vector.shape_cast %218 : vector<2x32xbf16> to vector<1x2x32xbf16>
    tpu.vector_store %arg12[%219, %c0_58, %c0_59], %222 {strides = array<i32>} : memref<8x2x32xbf16, #tpu.memory_space<vmem>>, vector<1x2x32xbf16>,
    %c8_i32 = arith.constant 8 : i32
    %c0_60 = arith.constant 0 : index
    %c0_61 = arith.constant 0 : index
    %c0_62 = arith.constant 0 : index
    %223 = vector.load %arg12[%c0_60, %c0_61, %c0_62] : memref<8x2x32xbf16, #tpu.memory_space<vmem>>, vector<8x2x32xbf16>
    %224 = vector.shape_cast %223 : vector<8x2x32xbf16> to vector<16x32xbf16>
    %c0_63 = arith.constant 0 : index
    %c0_64 = arith.constant 0 : index
    %225 = vector.load %arg5[%c0_63, %c0_64] : memref<32x128xf32, #tpu.memory_space<vmem>>, vector<32x128xf32>
    %226 = arith.truncf %225 : vector<32x128xf32> to vector<32x128xbf16>
    %cst_65 = arith.constant dense<0.000000e+00> : vector<16x128xf32>
    %227 = tpu.matmul %224, %226, %cst_65 {dimension_numbers = #tpu.dot_dimension_numbers<[1], [0], [0], [1], [0, 0, 1, 1], [], []>} : vector<16x32xbf16>, vector<32x128xbf16>, vector<16x128xf32> -> vector<16x128xf32>
    %228 = vector.shape_cast %227 : vector<16x128xf32> to vector<8x2x128xf32>
    %c0_66 = arith.constant 0 : index
    %c0_67 = arith.constant 0 : index
    %229 = vector.load %arg7[%c0_66, %c0_67] : memref<1x128xf32, #tpu.memory_space<vmem>>, vector<1x128xf32>
    %230 = vector.shape_cast %229 : vector<1x128xf32> to vector<1x1x128xf32>
    %231 = vector.broadcast %230 : vector<1x1x128xf32> to vector<8x2x128xf32>
    %232 = arith.addf %228, %231 : vector<8x2x128xf32>
    %c0_68 = arith.constant 0 : index
    %c0_69 = arith.constant 0 : index
    %c0_70 = arith.constant 0 : index
    %233 = vector.load %arg11[%c0_68, %c0_69, %c0_70] : memref<8x2x128xf32, #tpu.memory_space<vmem>>, vector<8x2x128xf32>
    tpu.vector_store %arg11[%c0_68, %c0_69, %c0_70], %232 {strides = array<i32>} : memref<8x2x128xf32, #tpu.memory_space<vmem>>, vector<8x2x128xf32>,
    %c0_71 = arith.constant 0 : index
    %c0_72 = arith.constant 0 : index
    %234 = vector.load %arg6[%c0_71, %c0_72] : memref<32x128xf32, #tpu.memory_space<vmem>>, vector<32x128xf32>
    %235 = arith.truncf %234 : vector<32x128xf32> to vector<32x128xbf16>
    %cst_73 = arith.constant 0.000000e+00 : f32
    %236 = vector.broadcast %cst_73 : f32 to vector<2x32xf32>
    %c0_i32_74 = arith.constant 0 : i32
    %237 = arith.index_cast %c0_i32_74 : i32 to index
    %c0_75 = arith.constant 0 : index
    %c0_76 = arith.constant 0 : index
    %238 = vector.load %arg11[%237, %c0_75, %c0_76] : memref<8x2x128xf32, #tpu.memory_space<vmem>>, vector<1x2x128xf32>
    %239 = vector.shape_cast %238 : vector<1x2x128xf32> to vector<2x128xf32>
    %240 = arith.truncf %236 : vector<2x32xf32> to vector<2x32xbf16>
    %cst_77 = arith.constant dense<0.000000e+00> : vector<2x128xf32>
    %241 = tpu.matmul %240, %235, %cst_77 {dimension_numbers = #tpu.dot_dimension_numbers<[1], [0], [0], [1], [0, 0, 1, 1], [], []>} : vector<2x32xbf16>, vector<32x128xbf16>, vector<2x128xf32> -> vector<2x128xf32>
    %242 = arith.addf %239, %241 : vector<2x128xf32>
    %243 = arith.negf %242 : vector<2x128xf32>
    %244 = math.exp %243 : vector<2x128xf32>
    %cst_78 = arith.constant 1.000000e+00 : f32
    %245 = vector.broadcast %cst_78 : f32 to vector<2x128xf32>
    %246 = arith.addf %245, %244 : vector<2x128xf32>
    %247 = arith.divf %245, %246 : vector<2x128xf32>
    %248 = vector.extract_strided_slice %242 {offsets = [0, 64], sizes = [2, 32], strides = [1, 1]} : vector<2x128xf32> to vector<2x32xf32>
    %249 = math.tanh %248 : vector<2x32xf32>
    %250 = vector.extract_strided_slice %247 {offsets = [0, 0], sizes = [2, 32], strides = [1, 1]} : vector<2x128xf32> to vector<2x32xf32>
    %251 = vector.extract_strided_slice %247 {offsets = [0, 32], sizes = [2, 32], strides = [1, 1]} : vector<2x128xf32> to vector<2x32xf32>
    %252 = vector.extract_strided_slice %247 {offsets = [0, 96], sizes = [2, 32], strides = [1, 1]} : vector<2x128xf32> to vector<2x32xf32>
    %253 = arith.mulf %251, %236 : vector<2x32xf32>
    %254 = arith.mulf %250, %249 : vector<2x32xf32>
    %255 = arith.addf %253, %254 : vector<2x32xf32>
    %256 = math.tanh %255 : vector<2x32xf32>
    %257 = arith.mulf %252, %256 : vector<2x32xf32>
    %c1_i32_79 = arith.constant 1 : i32
    %258 = arith.index_cast %c1_i32_79 : i32 to index
    %c0_80 = arith.constant 0 : index
    %c0_81 = arith.constant 0 : index
    %259 = vector.load %arg11[%258, %c0_80, %c0_81] : memref<8x2x128xf32, #tpu.memory_space<vmem>>, vector<1x2x128xf32>
    %260 = vector.shape_cast %259 : vector<1x2x128xf32> to vector<2x128xf32>
    %261 = arith.truncf %257 : vector<2x32xf32> to vector<2x32xbf16>
    %cst_82 = arith.constant dense<0.000000e+00> : vector<2x128xf32>
    %262 = tpu.matmul %261, %235, %cst_82 {dimension_numbers = #tpu.dot_dimension_numbers<[1], [0], [0], [1], [0, 0, 1, 1], [], []>} : vector<2x32xbf16>, vector<32x128xbf16>, vector<2x128xf32> -> vector<2x128xf32>
    %263 = arith.addf %260, %262 : vector<2x128xf32>
    %264 = arith.negf %263 : vector<2x128xf32>
    %265 = math.exp %264 : vector<2x128xf32>
    %cst_83 = arith.constant 1.000000e+00 : f32
    %266 = vector.broadcast %cst_83 : f32 to vector<2x128xf32>
    %267 = arith.addf %266, %265 : vector<2x128xf32>
    %268 = arith.divf %266, %267 : vector<2x128xf32>
    %269 = vector.extract_strided_slice %263 {offsets = [0, 64], sizes = [2, 32], strides = [1, 1]} : vector<2x128xf32> to vector<2x32xf32>
    %270 = math.tanh %269 : vector<2x32xf32>
    %271 = vector.extract_strided_slice %268 {offsets = [0, 0], sizes = [2, 32], strides = [1, 1]} : vector<2x128xf32> to vector<2x32xf32>
    %272 = vector.extract_strided_slice %268 {offsets = [0, 32], sizes = [2, 32], strides = [1, 1]} : vector<2x128xf32> to vector<2x32xf32>
    %273 = vector.extract_strided_slice %268 {offsets = [0, 96], sizes = [2, 32], strides = [1, 1]} : vector<2x128xf32> to vector<2x32xf32>
    %274 = arith.mulf %272, %255 : vector<2x32xf32>
    %275 = arith.mulf %271, %270 : vector<2x32xf32>
    %276 = arith.addf %274, %275 : vector<2x32xf32>
    %277 = math.tanh %276 : vector<2x32xf32>
    %278 = arith.mulf %273, %277 : vector<2x32xf32>
    %c2_i32_84 = arith.constant 2 : i32
    %279 = arith.index_cast %c2_i32_84 : i32 to index
    %c0_85 = arith.constant 0 : index
    %c0_86 = arith.constant 0 : index
    %280 = vector.load %arg11[%279, %c0_85, %c0_86] : memref<8x2x128xf32, #tpu.memory_space<vmem>>, vector<1x2x128xf32>
    %281 = vector.shape_cast %280 : vector<1x2x128xf32> to vector<2x128xf32>
    %282 = arith.truncf %278 : vector<2x32xf32> to vector<2x32xbf16>
    %cst_87 = arith.constant dense<0.000000e+00> : vector<2x128xf32>
    %283 = tpu.matmul %282, %235, %cst_87 {dimension_numbers = #tpu.dot_dimension_numbers<[1], [0], [0], [1], [0, 0, 1, 1], [], []>} : vector<2x32xbf16>, vector<32x128xbf16>, vector<2x128xf32> -> vector<2x128xf32>
    %284 = arith.addf %281, %283 : vector<2x128xf32>
    %285 = arith.negf %284 : vector<2x128xf32>
    %286 = math.exp %285 : vector<2x128xf32>
    %cst_88 = arith.constant 1.000000e+00 : f32
    %287 = vector.broadcast %cst_88 : f32 to vector<2x128xf32>
    %288 = arith.addf %287, %286 : vector<2x128xf32>
    %289 = arith.divf %287, %288 : vector<2x128xf32>
    %290 = vector.extract_strided_slice %284 {offsets = [0, 64], sizes = [2, 32], strides = [1, 1]} : vector<2x128xf32> to vector<2x32xf32>
    %291 = math.tanh %290 : vector<2x32xf32>
    %292 = vector.extract_strided_slice %289 {offsets = [0, 0], sizes = [2, 32], strides = [1, 1]} : vector<2x128xf32> to vector<2x32xf32>
    %293 = vector.extract_strided_slice %289 {offsets = [0, 32], sizes = [2, 32], strides = [1, 1]} : vector<2x128xf32> to vector<2x32xf32>
    %294 = vector.extract_strided_slice %289 {offsets = [0, 96], sizes = [2, 32], strides = [1, 1]} : vector<2x128xf32> to vector<2x32xf32>
    %295 = arith.mulf %293, %276 : vector<2x32xf32>
    %296 = arith.mulf %292, %291 : vector<2x32xf32>
    %297 = arith.addf %295, %296 : vector<2x32xf32>
    %298 = math.tanh %297 : vector<2x32xf32>
    %299 = arith.mulf %294, %298 : vector<2x32xf32>
    %c3_i32_89 = arith.constant 3 : i32
    %300 = arith.index_cast %c3_i32_89 : i32 to index
    %c0_90 = arith.constant 0 : index
    %c0_91 = arith.constant 0 : index
    %301 = vector.load %arg11[%300, %c0_90, %c0_91] : memref<8x2x128xf32, #tpu.memory_space<vmem>>, vector<1x2x128xf32>
    %302 = vector.shape_cast %301 : vector<1x2x128xf32> to vector<2x128xf32>
    %303 = arith.truncf %299 : vector<2x32xf32> to vector<2x32xbf16>
    %cst_92 = arith.constant dense<0.000000e+00> : vector<2x128xf32>
    %304 = tpu.matmul %303, %235, %cst_92 {dimension_numbers = #tpu.dot_dimension_numbers<[1], [0], [0], [1], [0, 0, 1, 1], [], []>} : vector<2x32xbf16>, vector<32x128xbf16>, vector<2x128xf32> -> vector<2x128xf32>
    %305 = arith.addf %302, %304 : vector<2x128xf32>
    %306 = arith.negf %305 : vector<2x128xf32>
    %307 = math.exp %306 : vector<2x128xf32>
    %cst_93 = arith.constant 1.000000e+00 : f32
    %308 = vector.broadcast %cst_93 : f32 to vector<2x128xf32>
    %309 = arith.addf %308, %307 : vector<2x128xf32>
    %310 = arith.divf %308, %309 : vector<2x128xf32>
    %311 = vector.extract_strided_slice %305 {offsets = [0, 64], sizes = [2, 32], strides = [1, 1]} : vector<2x128xf32> to vector<2x32xf32>
    %312 = math.tanh %311 : vector<2x32xf32>
    %313 = vector.extract_strided_slice %310 {offsets = [0, 0], sizes = [2, 32], strides = [1, 1]} : vector<2x128xf32> to vector<2x32xf32>
    %314 = vector.extract_strided_slice %310 {offsets = [0, 32], sizes = [2, 32], strides = [1, 1]} : vector<2x128xf32> to vector<2x32xf32>
    %315 = vector.extract_strided_slice %310 {offsets = [0, 96], sizes = [2, 32], strides = [1, 1]} : vector<2x128xf32> to vector<2x32xf32>
    %316 = arith.mulf %314, %297 : vector<2x32xf32>
    %317 = arith.mulf %313, %312 : vector<2x32xf32>
    %318 = arith.addf %316, %317 : vector<2x32xf32>
    %319 = math.tanh %318 : vector<2x32xf32>
    %320 = arith.mulf %315, %319 : vector<2x32xf32>
    %c4_i32_94 = arith.constant 4 : i32
    %321 = arith.index_cast %c4_i32_94 : i32 to index
    %c0_95 = arith.constant 0 : index
    %c0_96 = arith.constant 0 : index
    %322 = vector.load %arg11[%321, %c0_95, %c0_96] : memref<8x2x128xf32, #tpu.memory_space<vmem>>, vector<1x2x128xf32>
    %323 = vector.shape_cast %322 : vector<1x2x128xf32> to vector<2x128xf32>
    %324 = arith.truncf %320 : vector<2x32xf32> to vector<2x32xbf16>
    %cst_97 = arith.constant dense<0.000000e+00> : vector<2x128xf32>
    %325 = tpu.matmul %324, %235, %cst_97 {dimension_numbers = #tpu.dot_dimension_numbers<[1], [0], [0], [1], [0, 0, 1, 1], [], []>} : vector<2x32xbf16>, vector<32x128xbf16>, vector<2x128xf32> -> vector<2x128xf32>
    %326 = arith.addf %323, %325 : vector<2x128xf32>
    %327 = arith.negf %326 : vector<2x128xf32>
    %328 = math.exp %327 : vector<2x128xf32>
    %cst_98 = arith.constant 1.000000e+00 : f32
    %329 = vector.broadcast %cst_98 : f32 to vector<2x128xf32>
    %330 = arith.addf %329, %328 : vector<2x128xf32>
    %331 = arith.divf %329, %330 : vector<2x128xf32>
    %332 = vector.extract_strided_slice %326 {offsets = [0, 64], sizes = [2, 32], strides = [1, 1]} : vector<2x128xf32> to vector<2x32xf32>
    %333 = math.tanh %332 : vector<2x32xf32>
    %334 = vector.extract_strided_slice %331 {offsets = [0, 0], sizes = [2, 32], strides = [1, 1]} : vector<2x128xf32> to vector<2x32xf32>
    %335 = vector.extract_strided_slice %331 {offsets = [0, 32], sizes = [2, 32], strides = [1, 1]} : vector<2x128xf32> to vector<2x32xf32>
    %336 = vector.extract_strided_slice %331 {offsets = [0, 96], sizes = [2, 32], strides = [1, 1]} : vector<2x128xf32> to vector<2x32xf32>
    %337 = arith.mulf %335, %318 : vector<2x32xf32>
    %338 = arith.mulf %334, %333 : vector<2x32xf32>
    %339 = arith.addf %337, %338 : vector<2x32xf32>
    %340 = math.tanh %339 : vector<2x32xf32>
    %341 = arith.mulf %336, %340 : vector<2x32xf32>
    %c5_i32_99 = arith.constant 5 : i32
    %342 = arith.index_cast %c5_i32_99 : i32 to index
    %c0_100 = arith.constant 0 : index
    %c0_101 = arith.constant 0 : index
    %343 = vector.load %arg11[%342, %c0_100, %c0_101] : memref<8x2x128xf32, #tpu.memory_space<vmem>>, vector<1x2x128xf32>
    %344 = vector.shape_cast %343 : vector<1x2x128xf32> to vector<2x128xf32>
    %345 = arith.truncf %341 : vector<2x32xf32> to vector<2x32xbf16>
    %cst_102 = arith.constant dense<0.000000e+00> : vector<2x128xf32>
    %346 = tpu.matmul %345, %235, %cst_102 {dimension_numbers = #tpu.dot_dimension_numbers<[1], [0], [0], [1], [0, 0, 1, 1], [], []>} : vector<2x32xbf16>, vector<32x128xbf16>, vector<2x128xf32> -> vector<2x128xf32>
    %347 = arith.addf %344, %346 : vector<2x128xf32>
    %348 = arith.negf %347 : vector<2x128xf32>
    %349 = math.exp %348 : vector<2x128xf32>
    %cst_103 = arith.constant 1.000000e+00 : f32
    %350 = vector.broadcast %cst_103 : f32 to vector<2x128xf32>
    %351 = arith.addf %350, %349 : vector<2x128xf32>
    %352 = arith.divf %350, %351 : vector<2x128xf32>
    %353 = vector.extract_strided_slice %347 {offsets = [0, 64], sizes = [2, 32], strides = [1, 1]} : vector<2x128xf32> to vector<2x32xf32>
    %354 = math.tanh %353 : vector<2x32xf32>
    %355 = vector.extract_strided_slice %352 {offsets = [0, 0], sizes = [2, 32], strides = [1, 1]} : vector<2x128xf32> to vector<2x32xf32>
    %356 = vector.extract_strided_slice %352 {offsets = [0, 32], sizes = [2, 32], strides = [1, 1]} : vector<2x128xf32> to vector<2x32xf32>
    %357 = vector.extract_strided_slice %352 {offsets = [0, 96], sizes = [2, 32], strides = [1, 1]} : vector<2x128xf32> to vector<2x32xf32>
    %358 = arith.mulf %356, %339 : vector<2x32xf32>
    %359 = arith.mulf %355, %354 : vector<2x32xf32>
    %360 = arith.addf %358, %359 : vector<2x32xf32>
    %361 = math.tanh %360 : vector<2x32xf32>
    %362 = arith.mulf %357, %361 : vector<2x32xf32>
    %c6_i32_104 = arith.constant 6 : i32
    %363 = arith.index_cast %c6_i32_104 : i32 to index
    %c0_105 = arith.constant 0 : index
    %c0_106 = arith.constant 0 : index
    %364 = vector.load %arg11[%363, %c0_105, %c0_106] : memref<8x2x128xf32, #tpu.memory_space<vmem>>, vector<1x2x128xf32>
    %365 = vector.shape_cast %364 : vector<1x2x128xf32> to vector<2x128xf32>
    %366 = arith.truncf %362 : vector<2x32xf32> to vector<2x32xbf16>
    %cst_107 = arith.constant dense<0.000000e+00> : vector<2x128xf32>
    %367 = tpu.matmul %366, %235, %cst_107 {dimension_numbers = #tpu.dot_dimension_numbers<[1], [0], [0], [1], [0, 0, 1, 1], [], []>} : vector<2x32xbf16>, vector<32x128xbf16>, vector<2x128xf32> -> vector<2x128xf32>
    %368 = arith.addf %365, %367 : vector<2x128xf32>
    %369 = arith.negf %368 : vector<2x128xf32>
    %370 = math.exp %369 : vector<2x128xf32>
    %cst_108 = arith.constant 1.000000e+00 : f32
    %371 = vector.broadcast %cst_108 : f32 to vector<2x128xf32>
    %372 = arith.addf %371, %370 : vector<2x128xf32>
    %373 = arith.divf %371, %372 : vector<2x128xf32>
    %374 = vector.extract_strided_slice %368 {offsets = [0, 64], sizes = [2, 32], strides = [1, 1]} : vector<2x128xf32> to vector<2x32xf32>
    %375 = math.tanh %374 : vector<2x32xf32>
    %376 = vector.extract_strided_slice %373 {offsets = [0, 0], sizes = [2, 32], strides = [1, 1]} : vector<2x128xf32> to vector<2x32xf32>
    %377 = vector.extract_strided_slice %373 {offsets = [0, 32], sizes = [2, 32], strides = [1, 1]} : vector<2x128xf32> to vector<2x32xf32>
    %378 = vector.extract_strided_slice %373 {offsets = [0, 96], sizes = [2, 32], strides = [1, 1]} : vector<2x128xf32> to vector<2x32xf32>
    %379 = arith.mulf %377, %360 : vector<2x32xf32>
    %380 = arith.mulf %376, %375 : vector<2x32xf32>
    %381 = arith.addf %379, %380 : vector<2x32xf32>
    %382 = math.tanh %381 : vector<2x32xf32>
    %383 = arith.mulf %378, %382 : vector<2x32xf32>
    %c7_i32_109 = arith.constant 7 : i32
    %384 = arith.index_cast %c7_i32_109 : i32 to index
    %c0_110 = arith.constant 0 : index
    %c0_111 = arith.constant 0 : index
    %385 = vector.load %arg11[%384, %c0_110, %c0_111] : memref<8x2x128xf32, #tpu.memory_space<vmem>>, vector<1x2x128xf32>
    %386 = vector.shape_cast %385 : vector<1x2x128xf32> to vector<2x128xf32>
    %387 = arith.truncf %383 : vector<2x32xf32> to vector<2x32xbf16>
    %cst_112 = arith.constant dense<0.000000e+00> : vector<2x128xf32>
    %388 = tpu.matmul %387, %235, %cst_112 {dimension_numbers = #tpu.dot_dimension_numbers<[1], [0], [0], [1], [0, 0, 1, 1], [], []>} : vector<2x32xbf16>, vector<32x128xbf16>, vector<2x128xf32> -> vector<2x128xf32>
    %389 = arith.addf %386, %388 : vector<2x128xf32>
    %390 = arith.negf %389 : vector<2x128xf32>
    %391 = math.exp %390 : vector<2x128xf32>
    %cst_113 = arith.constant 1.000000e+00 : f32
    %392 = vector.broadcast %cst_113 : f32 to vector<2x128xf32>
    %393 = arith.addf %392, %391 : vector<2x128xf32>
    %394 = arith.divf %392, %393 : vector<2x128xf32>
    %395 = vector.extract_strided_slice %389 {offsets = [0, 64], sizes = [2, 32], strides = [1, 1]} : vector<2x128xf32> to vector<2x32xf32>
    %396 = math.tanh %395 : vector<2x32xf32>
    %397 = vector.extract_strided_slice %394 {offsets = [0, 0], sizes = [2, 32], strides = [1, 1]} : vector<2x128xf32> to vector<2x32xf32>
    %398 = vector.extract_strided_slice %394 {offsets = [0, 32], sizes = [2, 32], strides = [1, 1]} : vector<2x128xf32> to vector<2x32xf32>
    %399 = vector.extract_strided_slice %394 {offsets = [0, 96], sizes = [2, 32], strides = [1, 1]} : vector<2x128xf32> to vector<2x32xf32>
    %400 = arith.mulf %398, %381 : vector<2x32xf32>
    %401 = arith.mulf %397, %396 : vector<2x32xf32>
    %402 = arith.addf %400, %401 : vector<2x32xf32>
    %403 = math.tanh %402 : vector<2x32xf32>
    %404 = arith.mulf %399, %403 : vector<2x32xf32>
    %c8_i32_114 = arith.constant 8 : i32
    %c0_115 = arith.constant 0 : index
    %c0_116 = arith.constant 0 : index
    %405 = vector.load %arg8[%c0_115, %c0_116] : memref<32x128xf32, #tpu.memory_space<vmem>>, vector<32x128xf32>
    %cst_117 = arith.constant dense<0.000000e+00> : vector<2x128xf32>
    %406 = tpu.matmul %404, %405, %cst_117 {dimension_numbers = #tpu.dot_dimension_numbers<[1], [0], [0], [1], [0, 0, 1, 1], [], []>} : vector<2x32xf32>, vector<32x128xf32>, vector<2x128xf32> -> vector<2x128xf32>
    %c0_118 = arith.constant 0 : index
    %c0_119 = arith.constant 0 : index
    %407 = vector.load %arg9[%c0_118, %c0_119] : memref<1x128xf32, #tpu.memory_space<vmem>>, vector<1x128xf32>
    %408 = vector.broadcast %407 : vector<1x128xf32> to vector<2x128xf32>
    %409 = arith.addf %406, %408 : vector<2x128xf32>
    %c0_120 = arith.constant 0 : index
    %c0_121 = arith.constant 0 : index
    %410 = vector.load %arg10[%c0_120, %c0_121] : memref<2x128xf32, #tpu.memory_space<vmem>>, vector<2x128xf32>
    tpu.vector_store %arg10[%c0_120, %c0_121], %409 {strides = array<i32>} : memref<2x128xf32, #tpu.memory_space<vmem>>, vector<2x128xf32>,
    return
  }
  func.func @transform_0(%arg0: i32) -> (i32, i32, i32) {
    %c0_i32 = arith.constant 0 : i32
    %c0_i32_0 = arith.constant 0 : i32
    %c0_i32_1 = arith.constant 0 : i32
    return %c0_i32, %arg0, %c0_i32_0 : i32, i32, i32
  }
  func.func @transform_1(%arg0: i32) -> (i32, i32) {
    %c0_i32 = arith.constant 0 : i32
    %c0_i32_0 = arith.constant 0 : i32
    %c0_i32_1 = arith.constant 0 : i32
    return %c0_i32, %c0_i32_0 : i32, i32
  }
  func.func @transform_2(%arg0: i32) -> (i32, i32) {
    %c0_i32 = arith.constant 0 : i32
    %c0_i32_0 = arith.constant 0 : i32
    %c0_i32_1 = arith.constant 0 : i32
    return %c0_i32, %c0_i32_0 : i32, i32
  }
  func.func @transform_3(%arg0: i32) -> (i32, i32) {
    %c0_i32 = arith.constant 0 : i32
    %c0_i32_0 = arith.constant 0 : i32
    %c0_i32_1 = arith.constant 0 : i32
    return %c0_i32, %c0_i32_0 : i32, i32
  }
  func.func @transform_4(%arg0: i32) -> (i32, i32) {
    %c0_i32 = arith.constant 0 : i32
    %c0_i32_0 = arith.constant 0 : i32
    %c0_i32_1 = arith.constant 0 : i32
    return %c0_i32, %c0_i32_0 : i32, i32
  }
  func.func @transform_5(%arg0: i32) -> (i32, i32) {
    %c0_i32 = arith.constant 0 : i32
    %c0_i32_0 = arith.constant 0 : i32
    %c0_i32_1 = arith.constant 0 : i32
    return %c0_i32, %c0_i32_0 : i32, i32
  }
  func.func @transform_6(%arg0: i32) -> (i32, i32) {
    %c0_i32 = arith.constant 0 : i32
    %c0_i32_0 = arith.constant 0 : i32
    %c0_i32_1 = arith.constant 0 : i32
    return %c0_i32, %c0_i32_0 : i32, i32
  }
  func.func @transform_7(%arg0: i32) -> (i32, i32) {
    %c0_i32 = arith.constant 0 : i32
    %c0_i32_0 = arith.constant 0 : i32
    %c0_i32_1 = arith.constant 0 : i32
    return %c0_i32, %c0_i32_0 : i32, i32
  }
  func.func @transform_8(%arg0: i32) -> (i32, i32) {
    %c0_i32 = arith.constant 0 : i32
    %c0_i32_0 = arith.constant 0 : i32
    %c0_i32_1 = arith.constant 0 : i32
    return %c0_i32, %c0_i32_0 : i32, i32
  }
  func.func @transform_9(%arg0: i32) -> (i32, i32) {
    %c0_i32 = arith.constant 0 : i32
    %c0_i32_0 = arith.constant 0 : i32
    return %arg0, %c0_i32 : i32, i32
  }
}

</mosaic_0001>

<llo_original>
// kernel: lstm_model_forward.1
$region0: #{lstm_model_forward.1}
  #allocation0 [shape = 'u32[]', space=smem, size = 0x4, offset = 0x4, fixed_abs, tag = 'smem constant byte address 0x4 - core index']
  #allocation1 [shape = 'u32[144,128]{1,0:T(1,128)}', space=vmem, size = 0x12000, scoped, tag = 'internal scratch']
  #allocation2 [shape = 'f32[8,2,128]{2,1,0:T(2,128)}', space=vmem, size = 0x2000, scoped, tag = 'scratch operand']
  #allocation3 [shape = 'bf16[8,2,32]{2,1,0:T(2,128)(2,1)}', space=vmem, size = 0x1000, scoped, tag = 'scratch operand']
  %s0 = inlined_call_operand.vmem [shape: f32[8,2,4], index: 0, kind: input, shape index: {}]
  %s1 = inlined_call_operand.hbm [shape: f32[4,128], index: 1, kind: input, shape index: {}]
  %s2 = inlined_call_operand.vmem [shape: f32[32,128], index: 2, kind: input, shape index: {}]
  %s3 = inlined_call_operand.vmem [shape: f32[1,128], index: 3, kind: input, shape index: {}]
  %s4 = inlined_call_operand.hbm [shape: f32[32,128], index: 4, kind: input, shape index: {}]
  %s5 = inlined_call_operand.hbm [shape: f32[32,128], index: 5, kind: input, shape index: {}]
  %s6 = inlined_call_operand.vmem [shape: f32[1,128], index: 6, kind: input, shape index: {}]
  %s7 = inlined_call_operand.hbm [shape: f32[32,128], index: 7, kind: input, shape index: {}]
  %s8 = inlined_call_operand.hbm [shape: f32[1,128], index: 8, kind: input, shape index: {}]
  %s9 = inlined_call_operand.hbm [shape: f32[2,128], index: 9, kind: output, shape index: {}]
  %s10 = sld [smem:[#allocation0]]
  $region66: #{lstm_model_forward.1} parent=0
    _
  %s12 = ssub.s32 1, %s10
  %s13 = scalar_select 0, %s12, %s10
  $region1: #{lstm_model_forward.1} parent=0
    #allocation4 [shape = 'u8[2048]{0}', space=vmem, size = 0x800, scoped, tag = 'input window, operand 1, single buffered']
    #allocation5 [shape = 's32[1]{0}', space=sflag, size = 0x4, scoped, tag = 'scoped memory for lstm_model_forward.1']
    #allocation6 [shape = 's32[1]{0}', space=sflag, size = 0x4, scoped, tag = 'scoped memory for lstm_model_forward.1']
    #allocation7 [shape = 'u8[16384]{0}', space=vmem, size = 0x4000, scoped, tag = 'input window, operand 4, single buffered']
    #allocation8 [shape = 's32[1]{0}', space=sflag, size = 0x4, scoped, tag = 'scoped memory for lstm_model_forward.1']
    #allocation9 [shape = 'u8[16384]{0}', space=vmem, size = 0x4000, scoped, tag = 'input window, operand 5, single buffered']
    #allocation10 [shape = 'u8[16384]{0}', space=vmem, size = 0x4000, scoped, tag = 'input window, operand 7, single buffered']
    #allocation11 [shape = 's32[1]{0}', space=sflag, size = 0x4, scoped, tag = 'scoped memory for lstm_model_forward.1']
    #allocation12 [shape = 'u8[512]{0}', space=vmem, size = 0x400, scoped, tag = 'input window, operand 8, single buffered']
    #allocation13 [shape = 'u8[1024]{0}', space=vmem, size = 0x400, scoped, tag = 'output window, operand 0, single buffered']
    %14 = vsyncpa [#allocation5], 0
    %15 = vsyncpa [#allocation8], 0
    %16 = vsyncpa [#allocation11], 0
    %17 = vsyncpa [#allocation6], 0
    // Predicated region
    $region2: #{lstm_model_forward.1} parent=1 // pred_check
      _
    $region3: #{lstm_model_forward.1} parent=1 // pred_check_branch
      %19 = sbr.rel (0) target = $region5
    $region4: #{lstm_model_forward.1} parent=1 // pred_region
      _
    $region5: #{lstm_model_forward.1} parent=1 // pred_fallthru
      _
    // Predicated region
    $region6: #{lstm_model_forward.1} parent=1 // pred_check
      _
    $region7: #{lstm_model_forward.1} parent=1 // pred_check_branch
      %21 = sbr.rel (0) target = $region9
    $region8: #{lstm_model_forward.1} parent=1 // pred_region
      %s23 = ssub.s32 64, 64
      %24 = vsyncadd [#allocation5], %s23
      %s26 = sshll.u32 [#allocation4], 4
      %s27 = int_to_ptr.vmem [resolvable:$true] %s26
      %29 = dma.hbm_to_vmem [thread:$0]  %s1, 64, %s27, [#allocation5]
    $region9: #{lstm_model_forward.1} parent=1 // pred_fallthru
      _
    // Predicated region
    $region10: #{lstm_model_forward.1} parent=1 // pred_check
      _
    $region11: #{lstm_model_forward.1} parent=1 // pred_check_branch
      %31 = sbr.rel (0) target = $region13
    $region12: #{lstm_model_forward.1} parent=1 // pred_region
      _
    $region13: #{lstm_model_forward.1} parent=1 // pred_fallthru
      _
    // Predicated region
    $region14: #{lstm_model_forward.1} parent=1 // pred_check
      _
    $region15: #{lstm_model_forward.1} parent=1 // pred_check_branch
      %33 = sbr.rel (0) target = $region17
    $region16: #{lstm_model_forward.1} parent=1 // pred_region
      _
    $region17: #{lstm_model_forward.1} parent=1 // pred_fallthru
      _
    // Predicated region
    $region18: #{lstm_model_forward.1} parent=1 // pred_check
      _
    $region19: #{lstm_model_forward.1} parent=1 // pred_check_branch
      %35 = sbr.rel (0) target = $region21
    $region20: #{lstm_model_forward.1} parent=1 // pred_region
      %s37 = ssub.s32 512, 512
      %38 = vsyncadd [#allocation8], %s37
      %s39 = sshll.u32 [#allocation7], 4
      %s40 = int_to_ptr.vmem [resolvable:$true] %s39
      %45 = dma.hbm_to_vmem [thread:$0]  %s4, 512, %s40, [#allocation8], 128, 128, 8
    $region21: #{lstm_model_forward.1} parent=1 // pred_fallthru
      _
    // Predicated region
    $region22: #{lstm_model_forward.1} parent=1 // pred_check
      _
    $region23: #{lstm_model_forward.1} parent=1 // pred_check_branch
      %47 = sbr.rel (0) target = $region25
    $region24: #{lstm_model_forward.1} parent=1 // pred_region
      %s49 = ssub.s32 512, 512
      %50 = vsyncadd [#allocation8], %s49
      %s51 = sshll.u32 [#allocation9], 4
      %s52 = int_to_ptr.vmem [resolvable:$true] %s51
      %57 = dma.hbm_to_vmem [thread:$0]  %s5, 512, %s52, [#allocation8], 128, 128, 8
    $region25: #{lstm_model_forward.1} parent=1 // pred_fallthru
      _
    // Predicated region
    $region26: #{lstm_model_forward.1} parent=1 // pred_check
      _
    $region27: #{lstm_model_forward.1} parent=1 // pred_check_branch
      %59 = sbr.rel (0) target = $region29
    $region28: #{lstm_model_forward.1} parent=1 // pred_region
      _
    $region29: #{lstm_model_forward.1} parent=1 // pred_fallthru
      _
    // Predicated region
    $region30: #{lstm_model_forward.1} parent=1 // pred_check
      _
    $region31: #{lstm_model_forward.1} parent=1 // pred_check_branch
      %61 = sbr.rel (0) target = $region33
    $region32: #{lstm_model_forward.1} parent=1 // pred_region
      %s63 = ssub.s32 512, 512
      %64 = vsyncadd [#allocation11], %s63
      %s65 = sshll.u32 [#allocation10], 4
      %s66 = int_to_ptr.vmem [resolvable:$true] %s65
      %71 = dma.hbm_to_vmem [thread:$0]  %s7, 512, %s66, [#allocation11], 128, 128, 8
    $region33: #{lstm_model_forward.1} parent=1 // pred_fallthru
      _
    // Predicated region
    $region34: #{lstm_model_forward.1} parent=1 // pred_check
      _
    $region35: #{lstm_model_forward.1} parent=1 // pred_check_branch
      %73 = sbr.rel (0) target = $region37
    $region36: #{lstm_model_forward.1} parent=1 // pred_region
      %s75 = ssub.s32 16, 16
      %76 = vsyncadd [#allocation11], %s75
      %s78 = sshll.u32 [#allocation12], 4
      %s79 = int_to_ptr.vmem [resolvable:$true] %s78
      %81 = dma.hbm_to_vmem [thread:$0]  %s8, 16, %s79, [#allocation11]
    $region37: #{lstm_model_forward.1} parent=1 // pred_fallthru
      _
    // Predicated region
    $region38: #{lstm_model_forward.1} parent=1 // pred_check
      _
    $region39: #{lstm_model_forward.1} parent=1 // pred_check_branch
      %83 = sbr.rel (0) target = $region41
    $region40: #{lstm_model_forward.1} parent=1 // pred_region
      %84 = dma.done [#allocation5], 64
    $region41: #{lstm_model_forward.1} parent=1 // pred_fallthru
      _
    // Predicated region
    $region42: #{lstm_model_forward.1} parent=1 // pred_check
      _
    $region43: #{lstm_model_forward.1} parent=1 // pred_check_branch
      %86 = sbr.rel (0) target = $region45
    $region44: #{lstm_model_forward.1} parent=1 // pred_region
      %87 = dma.done [#allocation8], 512
    $region45: #{lstm_model_forward.1} parent=1 // pred_fallthru
      _
    // Predicated region
    $region46: #{lstm_model_forward.1} parent=1 // pred_check
      _
    $region47: #{lstm_model_forward.1} parent=1 // pred_check_branch
      %89 = sbr.rel (0) target = $region49
    $region48: #{lstm_model_forward.1} parent=1 // pred_region
      %90 = dma.done [#allocation8], 512
    $region49: #{lstm_model_forward.1} parent=1 // pred_fallthru
      _
    // Predicated region
    $region50: #{lstm_model_forward.1} parent=1 // pred_check
      _
    $region51: #{lstm_model_forward.1} parent=1 // pred_check_branch
      %92 = sbr.rel (0) target = $region53
    $region52: #{lstm_model_forward.1} parent=1 // pred_region
      %93 = dma.done [#allocation11], 512
    $region53: #{lstm_model_forward.1} parent=1 // pred_fallthru
      _
    // Predicated region
    $region54: #{lstm_model_forward.1} parent=1 // pred_check
      _
    $region55: #{lstm_model_forward.1} parent=1 // pred_check_branch
      %95 = sbr.rel (0) target = $region57
    $region56: #{lstm_model_forward.1} parent=1 // pred_region
      %96 = dma.done [#allocation11], 16
    $region57: #{lstm_model_forward.1} parent=1 // pred_fallthru
      _
    %v98 = vld [vmem:[%s0] sm:$0x3]
    %v99 = vld [vmem:[%s0 + $0x2] sm:$0x3]
    %v100 = vld [vmem:[%s0 + $0x4] sm:$0x3]
    %v101 = vld [vmem:[%s0 + $0x6] sm:$0x3]
    %v102 = vld [vmem:[%s0 + $0x8] sm:$0x3]
    %v103 = vld [vmem:[%s0 + $0xa] sm:$0x3]
    %v104 = vld [vmem:[%s0 + $0xc] sm:$0x3]
    %v105 = vld [vmem:[%s0 + $0xe] sm:$0x3]
    %v106 = vpack.c.bf16 %v98, %v98
    %v107 = vpack.c.bf16 %v99, %v99
    %v108 = vpack.c.bf16 %v100, %v100
    %v109 = vpack.c.bf16 %v101, %v101
    %v110 = vpack.c.bf16 %v102, %v102
    %v111 = vpack.c.bf16 %v103, %v103
    %v112 = vpack.c.bf16 %v104, %v104
    %v113 = vpack.c.bf16 %v105, %v105
    %v114 = vld [vmem:[#allocation4] sm:$0xf]
    %v115 = vpack.c.bf16 %v114, %v114
    %v124 = vcombine.low %v106, %v107
    %v125 = vcombine.low %v108, %v109
    %v126 = vcombine.low %v110, %v111
    %v127 = vcombine.low %v112, %v113
    %v129 = vunpack.c.l.s4 1966171168
    %v130 = vunpack.c.0.s8 %v129
    %v131 = vlaneseq
    %v132 = vshrl.u32 %v131, 7
    %v133 = vsub.s32 %v130, %v132
    %v134 = vrot.slane %v124, %v133
    %v136 = vunpack.c.l.s4 1966171168
    %v137 = vunpack.c.0.s8 %v136
    %v138 = vlaneseq
    %v139 = vshrl.u32 %v138, 7
    %v140 = vsub.s32 %v137, %v139
    %v141 = vrot.slane %v125, %v140
    %v143 = vunpack.c.l.s4 1966171168
    %v144 = vunpack.c.0.s8 %v143
    %v145 = vlaneseq
    %v146 = vshrl.u32 %v145, 7
    %v147 = vsub.s32 %v144, %v146
    %v148 = vrot.slane %v126, %v147
    %v150 = vunpack.c.l.s4 1966171168
    %v151 = vunpack.c.0.s8 %v150
    %v152 = vlaneseq
    %v153 = vshrl.u32 %v152, 7
    %v154 = vsub.s32 %v151, %v153
    %v155 = vrot.slane %v127, %v154
    %v156 = vcombine.low %v134, %v141
    %v157 = vcombine.low %v148, %v155
    %v159 = vunpack.c.l.s4 1966171168
    %v160 = vunpack.c.0.s8 %v159
    %v161 = vlaneseq
    %v162 = vshrl.u32 %v161, 7
    %v163 = vsub.s32 %v160, %v162
    %v164 = vrot.slane %v156, %v163
    %v166 = vunpack.c.l.s4 1966171168
    %v167 = vunpack.c.0.s8 %v166
    %v168 = vlaneseq
    %v169 = vshrl.u32 %v168, 7
    %v170 = vsub.s32 %v167, %v169
    %v171 = vrot.slane %v157, %v170
    %v172 = vcombine.low %v164, %v171
    %vm173 = vcmask 31744
    %v175 = vsel %vm173, %v172, 0
    %vm177 = vcmask 1041408
    %v179 = vsel %vm177, %v115, 0
    %181 = vmatprep.subr.bf16.mxu0 0
    %182 = vmatpush1.bf16.msra.mxu0 0
    %183 = vmatprep.subr.bf16.mxu0 0
    %184 = vmatpush1.bf16.msra.mxu0 0
    %185 = vmatprep.subr.bf16.mxu0 0
    %186 = vmatpush1.bf16.msra.mxu0 0
    %187 = vmatprep.subr.bf16.mxu0 0
    %188 = vmatpush1.bf16.msra.mxu0 0
    %189 = vmatprep.subr.bf16.mxu0 0
    %190 = vmatpush1.bf16.msra.mxu0 0
    %191 = vmatprep.subr.bf16.mxu0 0
    %192 = vmatpush1.bf16.msra.mxu0 0
    %193 = vmatprep.subr.bf16.mxu0 0
    %194 = vmatpush1.bf16.msra.mxu0 0
    %195 = vmatprep.subr.bf16.mxu0 0
    %196 = vmatpush1.bf16.msra.mxu0 %v179
    %197 = vmatprep.subr.bf16.mxu0 0
    %198 = vmatpush2.bf16.msra.mxu0 0
    %199 = vmatprep.subr.bf16.mxu0 0
    %200 = vmatpush2.bf16.msra.mxu0 0
    %201 = vmatprep.subr.bf16.mxu0 0
    %202 = vmatpush2.bf16.msra.mxu0 0
    %203 = vmatprep.subr.bf16.mxu0 0
    %204 = vmatpush2.bf16.msra.mxu0 0
    %205 = vmatprep.subr.bf16.mxu0 0
    %206 = vmatpush2.bf16.msra.mxu0 0
    %207 = vmatprep.subr.bf16.mxu0 0
    %208 = vmatpush2.bf16.msra.mxu0 0
    %209 = vmatprep.subr.bf16.mxu0 0
    %210 = vmatpush2.bf16.msra.mxu0 0
    %211 = vmatprep.subr.bf16.mxu0 0
    %212 = vmatpush2.bf16.msra.mxu0 0
    %213 = vmatprep.mubr.bf16.mxu0 0
    %214 = vmatmul.mubr.bf16.gmra.mxu0 %v175
    %v215 = vpop.f32.mrf.mxu0
    %v216 = vadd.f32 0.0, %v215
    %v217 = vpop.f32.mrf.mxu0
    %v218 = vpop.f32.mrf.mxu0
    %v219 = vadd.f32 0.0, %v218
    %v220 = vpop.f32.mrf.mxu0
    %221 = vdwg.mxu0
    %v224 = vcombine.high %v216, %v216
    %v226 = vunpack.c.l.s4 1983009808
    %v227 = vunpack.c.0.s8 %v226
    %v228 = vlaneseq
    %v229 = vshrl.u32 %v228, 7
    %v230 = vsub.s32 %v227, %v229
    %v231 = vrot.slane %v216, %v230
    %v233 = vunpack.c.l.s4 1983009808
    %v234 = vunpack.c.0.s8 %v233
    %v235 = vlaneseq
    %v236 = vshrl.u32 %v235, 7
    %v237 = vsub.s32 %v234, %v236
    %v238 = vrot.slane %v224, %v237
    %v239 = vcombine.high %v231, %v231
    %v240 = vcombine.high %v238, %v238
    %v241 = vcombine.high %v219, %v219
    %v243 = vunpack.c.l.s4 1983009808
    %v244 = vunpack.c.0.s8 %v243
    %v245 = vlaneseq
    %v246 = vshrl.u32 %v245, 7
    %v247 = vsub.s32 %v244, %v246
    %v248 = vrot.slane %v219, %v247
    %v250 = vunpack.c.l.s4 1983009808
    %v251 = vunpack.c.0.s8 %v250
    %v252 = vlaneseq
    %v253 = vshrl.u32 %v252, 7
    %v254 = vsub.s32 %v251, %v253
    %v255 = vrot.slane %v241, %v254
    %v256 = vcombine.high %v248, %v248
    %v257 = vcombine.high %v255, %v255
    %v266 = vld [vmem:[%s3] sm:$0x1]
    %v268 = vlaneseq
    %v269 = vshrl.u32 %v268, 7
    %v270 = vsub.s32 0, %v269
    %v271 = vrot.slane %v266, %v270
    %v273 = vadd.f32 %v231, %v271
    %v274 = vadd.f32 %v239, %v271
    %v275 = vadd.f32 %v238, %v271
    %v276 = vadd.f32 %v240, %v271
    %v277 = vadd.f32 %v248, %v271
    %v278 = vadd.f32 %v256, %v271
    %v279 = vadd.f32 %v255, %v271
    %v280 = vadd.f32 %v257, %v271
    %281 = vst [vmem:[#allocation2] sm:$0x3] %v273
    %282 = vst [vmem:[#allocation2 + $0x2] sm:$0x3] %v274
    %283 = vst [vmem:[#allocation2 + $0x4] sm:$0x3] %v275
    %284 = vst [vmem:[#allocation2 + $0x6] sm:$0x3] %v276
    %285 = vst [vmem:[#allocation2 + $0x8] sm:$0x3] %v277
    %286 = vst [vmem:[#allocation2 + $0xa] sm:$0x3] %v278
    %287 = vst [vmem:[#allocation2 + $0xc] sm:$0x3] %v279
    %288 = vst [vmem:[#allocation2 + $0xe] sm:$0x3] %v280
    %v289 = vld [vmem:[%s2] sm:$0xff]
    %v290 = vld [vmem:[%s2 + $0x8] sm:$0xff]
    %v291 = vld [vmem:[%s2 + $0x10] sm:$0xff]
    %v292 = vld [vmem:[%s2 + $0x18] sm:$0xff]
    %v293 = vpack.c.bf16 %v290, %v289
    %v294 = vpack.c.bf16 %v292, %v291
    %v295 = vld [vmem:[#allocation2] sm:$0x3]
    %vm296 = vcmask 261120
    %v298 = vsel %vm296, 0, 0
    %300 = vmatprep.subr.bf16.mxu0 0
    %301 = vmatpush1.bf16.msra.mxu0 0
    %302 = vmatprep.subr.bf16.mxu0 0
    %303 = vmatpush1.bf16.msra.mxu0 0
    %304 = vmatprep.subr.bf16.mxu0 0
    %305 = vmatpush1.bf16.msra.mxu0 0
    %306 = vmatprep.subr.bf16.mxu0 0
    %307 = vmatpush1.bf16.msra.mxu0 0
    %308 = vmatprep.subr.bf16.mxu0 0
    %309 = vmatpush1.bf16.msra.mxu0 0
    %310 = vmatprep.subr.bf16.mxu0 0
    %311 = vmatpush1.bf16.msra.mxu0 0
    %312 = vmatprep.subr.bf16.mxu0 0
    %313 = vmatpush1.bf16.msra.mxu0 %v294
    %314 = vmatprep.subr.bf16.mxu0 0
    %315 = vmatpush1.bf16.msra.mxu0 %v293
    %316 = vmatprep.subr.bf16.mxu0 0
    %317 = vmatpush2.bf16.msra.mxu0 0
    %318 = vmatprep.subr.bf16.mxu0 0
    %319 = vmatpush2.bf16.msra.mxu0 0
    %320 = vmatprep.subr.bf16.mxu0 0
    %321 = vmatpush2.bf16.msra.mxu0 0
    %322 = vmatprep.subr.bf16.mxu0 0
    %323 = vmatpush2.bf16.msra.mxu0 0
    %324 = vmatprep.subr.bf16.mxu0 0
    %325 = vmatpush2.bf16.msra.mxu0 0
    %326 = vmatprep.subr.bf16.mxu0 0
    %327 = vmatpush2.bf16.msra.mxu0 0
    %328 = vmatprep.subr.bf16.mxu0 0
    %329 = vmatpush2.bf16.msra.mxu0 0
    %330 = vmatprep.subr.bf16.mxu0 0
    %331 = vmatpush2.bf16.msra.mxu0 0
    %332 = vmatprep.mubr.bf16.mxu0 0
    %333 = vmatmul.mubr.bf16.gmra.mxu0 %v298
    %v334 = vpop.f32.mrf.mxu0
    %v335 = vadd.f32 0.0, %v334
    %v336 = vpop.f32.mrf.mxu0
    %v337 = vpop.f32.mrf.mxu0
    %v338 = vpop.f32.mrf.mxu0
    %339 = vdwg.mxu0
    %v340 = vadd.f32 %v295, %v335
    %v341 = vxor.u32 %v340, 2147483648
    %v342 = vmul.f32 %v341, 1.442695
    %v343 = vpow.pop %v342
    %v344 = vadd.f32 %v343, 1.0
    %v345 = vrcp.pop %v344
    %v346 = vmul.f32 1.0, %v345
    %v347 = vtanh.pop %v340
    %v348 = vmul.f32 %v346, 0.0
    %350 = vrot.lane.b32.xlu0 %v347, 64
    %v351 = vpop.permute.xlu0 %350
    %v353 = vmul.f32 %v346, %v351
    %355 = vrot.lane.b32.xlu0 %v353, 32
    %v356 = vpop.permute.xlu0 %355
    %v358 = vadd.f32 %v348, %v356
    %v359 = vtanh.pop %v358
    %361 = vrot.lane.b32.xlu0 %v359, 64
    %v362 = vpop.permute.xlu0 %361
    %v364 = vmul.f32 %v346, %v362
    %v365 = vpack.c.bf16 %v364, %v364
    %v368 = vunpack.c.l.s4 1966171168
    %v369 = vunpack.c.0.s8 %v368
    %v370 = vlaneseq
    %v371 = vshrl.u32 %v370, 7
    %v372 = vsub.s32 %v369, %v371
    %v373 = vrot.slane %v365, %v372
    %v375 = vunpack.c.l.s4 1966171168
    %v376 = vunpack.c.0.s8 %v375
    %v377 = vlaneseq
    %v378 = vshrl.u32 %v377, 7
    %v379 = vsub.s32 %v376, %v378
    %v380 = vrot.slane %v373, %v379
    %381 = vrot.lane.b32.xlu0 %v380, 32
    %v382 = vpop.permute.xlu0 %381
    %vm384 = vcmask 253952
    %385 = vst.msk [vmem:[#allocation3] sm:$0x1] %vm384, %v382
    %s386 = scalar_lea.vmem [#allocation2], 2
    %v387 = vld [vmem:[%s386] sm:$0x3]
    %388 = vrot.lane.b32.xlu0 %v365, 32
    %v389 = vpop.permute.xlu0 %388
    %v391 = vsel %vm296, %v389, 0
    %393 = vmatprep.subr.bf16.mxu0 0
    %394 = vmatpush1.bf16.msra.mxu0 0
    %395 = vmatprep.subr.bf16.mxu0 0
    %396 = vmatpush1.bf16.msra.mxu0 0
    %397 = vmatprep.subr.bf16.mxu0 0
    %398 = vmatpush1.bf16.msra.mxu0 0
    %399 = vmatprep.subr.bf16.mxu0 0
    %400 = vmatpush1.bf16.msra.mxu0 0
    %401 = vmatprep.subr.bf16.mxu0 0
    %402 = vmatpush1.bf16.msra.mxu0 0
    %403 = vmatprep.subr.bf16.mxu0 0
    %404 = vmatpush1.bf16.msra.mxu0 0
    %405 = vmatprep.subr.bf16.mxu0 0
    %406 = vmatpush1.bf16.msra.mxu0 %v294
    %407 = vmatprep.subr.bf16.mxu0 0
    %408 = vmatpush1.bf16.msra.mxu0 %v293
    %409 = vmatprep.subr.bf16.mxu0 0
    %410 = vmatpush2.bf16.msra.mxu0 0
    %411 = vmatprep.subr.bf16.mxu0 0
    %412 = vmatpush2.bf16.msra.mxu0 0
    %413 = vmatprep.subr.bf16.mxu0 0
    %414 = vmatpush2.bf16.msra.mxu0 0
    %415 = vmatprep.subr.bf16.mxu0 0
    %416 = vmatpush2.bf16.msra.mxu0 0
    %417 = vmatprep.subr.bf16.mxu0 0
    %418 = vmatpush2.bf16.msra.mxu0 0
    %419 = vmatprep.subr.bf16.mxu0 0
    %420 = vmatpush2.bf16.msra.mxu0 0
    %421 = vmatprep.subr.bf16.mxu0 0
    %422 = vmatpush2.bf16.msra.mxu0 0
    %423 = vmatprep.subr.bf16.mxu0 0
    %424 = vmatpush2.bf16.msra.mxu0 0
    %425 = vmatprep.mubr.bf16.mxu0 0
    %426 = vmatmul.mubr.bf16.gmra.mxu0 %v391
    %v427 = vpop.f32.mrf.mxu0
    %v428 = vadd.f32 0.0, %v427
    %v429 = vpop.f32.mrf.mxu0
    %v430 = vpop.f32.mrf.mxu0
    %v431 = vpop.f32.mrf.mxu0
    %432 = vdwg.mxu0
    %v433 = vadd.f32 %v387, %v428
    %v434 = vxor.u32 %v433, 2147483648
    %v435 = vmul.f32 %v434, 1.442695
    %v436 = vpow.pop %v435
    %v437 = vadd.f32 %v436, 1.0
    %v438 = vrcp.pop %v437
    %v439 = vmul.f32 1.0, %v438
    %v440 = vtanh.pop %v433
    %v441 = vmul.f32 %v439, %v358
    %443 = vrot.lane.b32.xlu0 %v440, 64
    %v444 = vpop.permute.xlu0 %443
    %v446 = vmul.f32 %v439, %v444
    %448 = vrot.lane.b32.xlu0 %v446, 32
    %v449 = vpop.permute.xlu0 %448
    %v451 = vadd.f32 %v441, %v449
    %v452 = vtanh.pop %v451
    %454 = vrot.lane.b32.xlu0 %v452, 64
    %v455 = vpop.permute.xlu0 %454
    %v457 = vmul.f32 %v439, %v455
    %v458 = vpack.c.bf16 %v457, %v457
    %v461 = vunpack.c.l.s4 1966171168
    %v462 = vunpack.c.0.s8 %v461
    %v463 = vlaneseq
    %v464 = vshrl.u32 %v463, 7
    %v465 = vsub.s32 %v462, %v464
    %v466 = vrot.slane %v458, %v465
    %v468 = vunpack.c.l.s4 1966171168
    %v469 = vunpack.c.0.s8 %v468
    %v470 = vlaneseq
    %v471 = vshrl.u32 %v470, 7
    %v472 = vsub.s32 %v469, %v471
    %v473 = vrot.slane %v466, %v472
    %474 = vrot.lane.b32.xlu0 %v473, 32
    %v475 = vpop.permute.xlu0 %474
    %s477 = scalar_lea.vmem [#allocation3], 1
    %478 = vst.msk [vmem:[%s477] sm:$0x1] %vm384, %v475
    %s479 = scalar_lea.vmem [#allocation2], 4
    %v480 = vld [vmem:[%s479] sm:$0x3]
    %481 = vrot.lane.b32.xlu0 %v458, 32
    %v482 = vpop.permute.xlu0 %481
    %v484 = vsel %vm296, %v482, 0
    %486 = vmatprep.subr.bf16.mxu0 0
    %487 = vmatpush1.bf16.msra.mxu0 0
    %488 = vmatprep.subr.bf16.mxu0 0
    %489 = vmatpush1.bf16.msra.mxu0 0
    %490 = vmatprep.subr.bf16.mxu0 0
    %491 = vmatpush1.bf16.msra.mxu0 0
    %492 = vmatprep.subr.bf16.mxu0 0
    %493 = vmatpush1.bf16.msra.mxu0 0
    %494 = vmatprep.subr.bf16.mxu0 0
    %495 = vmatpush1.bf16.msra.mxu0 0
    %496 = vmatprep.subr.bf16.mxu0 0
    %497 = vmatpush1.bf16.msra.mxu0 0
    %498 = vmatprep.subr.bf16.mxu0 0
    %499 = vmatpush1.bf16.msra.mxu0 %v294
    %500 = vmatprep.subr.bf16.mxu0 0
    %501 = vmatpush1.bf16.msra.mxu0 %v293
    %502 = vmatprep.subr.bf16.mxu0 0
    %503 = vmatpush2.bf16.msra.mxu0 0
    %504 = vmatprep.subr.bf16.mxu0 0
    %505 = vmatpush2.bf16.msra.mxu0 0
    %506 = vmatprep.subr.bf16.mxu0 0
    %507 = vmatpush2.bf16.msra.mxu0 0
    %508 = vmatprep.subr.bf16.mxu0 0
    %509 = vmatpush2.bf16.msra.mxu0 0
    %510 = vmatprep.subr.bf16.mxu0 0
    %511 = vmatpush2.bf16.msra.mxu0 0
    %512 = vmatprep.subr.bf16.mxu0 0
    %513 = vmatpush2.bf16.msra.mxu0 0
    %514 = vmatprep.subr.bf16.mxu0 0
    %515 = vmatpush2.bf16.msra.mxu0 0
    %516 = vmatprep.subr.bf16.mxu0 0
    %517 = vmatpush2.bf16.msra.mxu0 0
    %518 = vmatprep.mubr.bf16.mxu0 0
    %519 = vmatmul.mubr.bf16.gmra.mxu0 %v484
    %v520 = vpop.f32.mrf.mxu0
    %v521 = vadd.f32 0.0, %v520
    %v522 = vpop.f32.mrf.mxu0
    %v523 = vpop.f32.mrf.mxu0
    %v524 = vpop.f32.mrf.mxu0
    %525 = vdwg.mxu0
    %v526 = vadd.f32 %v480, %v521
    %v527 = vxor.u32 %v526, 2147483648
    %v528 = vmul.f32 %v527, 1.442695
    %v529 = vpow.pop %v528
    %v530 = vadd.f32 %v529, 1.0
    %v531 = vrcp.pop %v530
    %v532 = vmul.f32 1.0, %v531
    %v533 = vtanh.pop %v526
    %v534 = vmul.f32 %v532, %v451
    %536 = vrot.lane.b32.xlu0 %v533, 64
    %v537 = vpop.permute.xlu0 %536
    %v539 = vmul.f32 %v532, %v537
    %541 = vrot.lane.b32.xlu0 %v539, 32
    %v542 = vpop.permute.xlu0 %541
    %v544 = vadd.f32 %v534, %v542
    %v545 = vtanh.pop %v544
    %547 = vrot.lane.b32.xlu0 %v545, 64
    %v548 = vpop.permute.xlu0 %547
    %v550 = vmul.f32 %v532, %v548
    %v551 = vpack.c.bf16 %v550, %v550
    %v554 = vunpack.c.l.s4 1966171168
    %v555 = vunpack.c.0.s8 %v554
    %v556 = vlaneseq
    %v557 = vshrl.u32 %v556, 7
    %v558 = vsub.s32 %v555, %v557
    %v559 = vrot.slane %v551, %v558
    %v561 = vunpack.c.l.s4 1966171168
    %v562 = vunpack.c.0.s8 %v561
    %v563 = vlaneseq
    %v564 = vshrl.u32 %v563, 7
    %v565 = vsub.s32 %v562, %v564
    %v566 = vrot.slane %v559, %v565
    %567 = vrot.lane.b32.xlu0 %v566, 32
    %v568 = vpop.permute.xlu0 %567
    %s570 = scalar_lea.vmem [#allocation3], 2
    %571 = vst.msk [vmem:[%s570] sm:$0x1] %vm384, %v568
    %s572 = scalar_lea.vmem [#allocation2], 6
    %v573 = vld [vmem:[%s572] sm:$0x3]
    %574 = vrot.lane.b32.xlu0 %v551, 32
    %v575 = vpop.permute.xlu0 %574
    %v577 = vsel %vm296, %v575, 0
    %579 = vmatprep.subr.bf16.mxu0 0
    %580 = vmatpush1.bf16.msra.mxu0 0
    %581 = vmatprep.subr.bf16.mxu0 0
    %582 = vmatpush1.bf16.msra.mxu0 0
    %583 = vmatprep.subr.bf16.mxu0 0
    %584 = vmatpush1.bf16.msra.mxu0 0
    %585 = vmatprep.subr.bf16.mxu0 0
    %586 = vmatpush1.bf16.msra.mxu0 0
    %587 = vmatprep.subr.bf16.mxu0 0
    %588 = vmatpush1.bf16.msra.mxu0 0
    %589 = vmatprep.subr.bf16.mxu0 0
    %590 = vmatpush1.bf16.msra.mxu0 0
    %591 = vmatprep.subr.bf16.mxu0 0
    %592 = vmatpush1.bf16.msra.mxu0 %v294
    %593 = vmatprep.subr.bf16.mxu0 0
    %594 = vmatpush1.bf16.msra.mxu0 %v293
    %595 = vmatprep.subr.bf16.mxu0 0
    %596 = vmatpush2.bf16.msra.mxu0 0
    %597 = vmatprep.subr.bf16.mxu0 0
    %598 = vmatpush2.bf16.msra.mxu0 0
    %599 = vmatprep.subr.bf16.mxu0 0
    %600 = vmatpush2.bf16.msra.mxu0 0
    %601 = vmatprep.subr.bf16.mxu0 0
    %602 = vmatpush2.bf16.msra.mxu0 0
    %603 = vmatprep.subr.bf16.mxu0 0
    %604 = vmatpush2.bf16.msra.mxu0 0
    %605 = vmatprep.subr.bf16.mxu0 0
    %606 = vmatpush2.bf16.msra.mxu0 0
    %607 = vmatprep.subr.bf16.mxu0 0
    %608 = vmatpush2.bf16.msra.mxu0 0
    %609 = vmatprep.subr.bf16.mxu0 0
    %610 = vmatpush2.bf16.msra.mxu0 0
    %611 = vmatprep.mubr.bf16.mxu0 0
    %612 = vmatmul.mubr.bf16.gmra.mxu0 %v577
    %v613 = vpop.f32.mrf.mxu0
    %v614 = vadd.f32 0.0, %v613
    %v615 = vpop.f32.mrf.mxu0
    %v616 = vpop.f32.mrf.mxu0
    %v617 = vpop.f32.mrf.mxu0
    %618 = vdwg.mxu0
    %v619 = vadd.f32 %v573, %v614
    %v620 = vxor.u32 %v619, 2147483648
    %v621 = vmul.f32 %v620, 1.442695
    %v622 = vpow.pop %v621
    %v623 = vadd.f32 %v622, 1.0
    %v624 = vrcp.pop %v623
    %v625 = vmul.f32 1.0, %v624
    %v626 = vtanh.pop %v619
    %v627 = vmul.f32 %v625, %v544
    %629 = vrot.lane.b32.xlu0 %v626, 64
    %v630 = vpop.permute.xlu0 %629
    %v632 = vmul.f32 %v625, %v630
    %634 = vrot.lane.b32.xlu0 %v632, 32
    %v635 = vpop.permute.xlu0 %634
    %v637 = vadd.f32 %v627, %v635
    %v638 = vtanh.pop %v637
    %640 = vrot.lane.b32.xlu0 %v638, 64
    %v641 = vpop.permute.xlu0 %640
    %v643 = vmul.f32 %v625, %v641
    %v644 = vpack.c.bf16 %v643, %v643
    %v647 = vunpack.c.l.s4 1966171168
    %v648 = vunpack.c.0.s8 %v647
    %v649 = vlaneseq
    %v650 = vshrl.u32 %v649, 7
    %v651 = vsub.s32 %v648, %v650
    %v652 = vrot.slane %v644, %v651
    %v654 = vunpack.c.l.s4 1966171168
    %v655 = vunpack.c.0.s8 %v654
    %v656 = vlaneseq
    %v657 = vshrl.u32 %v656, 7
    %v658 = vsub.s32 %v655, %v657
    %v659 = vrot.slane %v652, %v658
    %660 = vrot.lane.b32.xlu0 %v659, 32
    %v661 = vpop.permute.xlu0 %660
    %s663 = scalar_lea.vmem [#allocation3], 3
    %664 = vst.msk [vmem:[%s663] sm:$0x1] %vm384, %v661
    %s665 = scalar_lea.vmem [#allocation2], 8
    %v666 = vld [vmem:[%s665] sm:$0x3]
    %667 = vrot.lane.b32.xlu0 %v644, 32
    %v668 = vpop.permute.xlu0 %667
    %v670 = vsel %vm296, %v668, 0
    %672 = vmatprep.subr.bf16.mxu0 0
    %673 = vmatpush1.bf16.msra.mxu0 0
    %674 = vmatprep.subr.bf16.mxu0 0
    %675 = vmatpush1.bf16.msra.mxu0 0
    %676 = vmatprep.subr.bf16.mxu0 0
    %677 = vmatpush1.bf16.msra.mxu0 0
    %678 = vmatprep.subr.bf16.mxu0 0
    %679 = vmatpush1.bf16.msra.mxu0 0
    %680 = vmatprep.subr.bf16.mxu0 0
    %681 = vmatpush1.bf16.msra.mxu0 0
    %682 = vmatprep.subr.bf16.mxu0 0
    %683 = vmatpush1.bf16.msra.mxu0 0
    %684 = vmatprep.subr.bf16.mxu0 0
    %685 = vmatpush1.bf16.msra.mxu0 %v294
    %686 = vmatprep.subr.bf16.mxu0 0
    %687 = vmatpush1.bf16.msra.mxu0 %v293
    %688 = vmatprep.subr.bf16.mxu0 0
    %689 = vmatpush2.bf16.msra.mxu0 0
    %690 = vmatprep.subr.bf16.mxu0 0
    %691 = vmatpush2.bf16.msra.mxu0 0
    %692 = vmatprep.subr.bf16.mxu0 0
    %693 = vmatpush2.bf16.msra.mxu0 0
    %694 = vmatprep.subr.bf16.mxu0 0
    %695 = vmatpush2.bf16.msra.mxu0 0
    %696 = vmatprep.subr.bf16.mxu0 0
    %697 = vmatpush2.bf16.msra.mxu0 0
    %698 = vmatprep.subr.bf16.mxu0 0
    %699 = vmatpush2.bf16.msra.mxu0 0
    %700 = vmatprep.subr.bf16.mxu0 0
    %701 = vmatpush2.bf16.msra.mxu0 0
    %702 = vmatprep.subr.bf16.mxu0 0
    %703 = vmatpush2.bf16.msra.mxu0 0
    %704 = vmatprep.mubr.bf16.mxu0 0
    %705 = vmatmul.mubr.bf16.gmra.mxu0 %v670
    %v706 = vpop.f32.mrf.mxu0
    %v707 = vadd.f32 0.0, %v706
    %v708 = vpop.f32.mrf.mxu0
    %v709 = vpop.f32.mrf.mxu0
    %v710 = vpop.f32.mrf.mxu0
    %711 = vdwg.mxu0
    %v712 = vadd.f32 %v666, %v707
    %v713 = vxor.u32 %v712, 2147483648
    %v714 = vmul.f32 %v713, 1.442695
    %v715 = vpow.pop %v714
    %v716 = vadd.f32 %v715, 1.0
    %v717 = vrcp.pop %v716
    %v718 = vmul.f32 1.0, %v717
    %v719 = vtanh.pop %v712
    %v720 = vmul.f32 %v718, %v637
    %722 = vrot.lane.b32.xlu0 %v719, 64
    %v723 = vpop.permute.xlu0 %722
    %v725 = vmul.f32 %v718, %v723
    %727 = vrot.lane.b32.xlu0 %v725, 32
    %v728 = vpop.permute.xlu0 %727
    %v730 = vadd.f32 %v720, %v728
    %v731 = vtanh.pop %v730
    %733 = vrot.lane.b32.xlu0 %v731, 64
    %v734 = vpop.permute.xlu0 %733
    %v736 = vmul.f32 %v718, %v734
    %v737 = vpack.c.bf16 %v736, %v736
    %v740 = vunpack.c.l.s4 1966171168
    %v741 = vunpack.c.0.s8 %v740
    %v742 = vlaneseq
    %v743 = vshrl.u32 %v742, 7
    %v744 = vsub.s32 %v741, %v743
    %v745 = vrot.slane %v737, %v744
    %v747 = vunpack.c.l.s4 1966171168
    %v748 = vunpack.c.0.s8 %v747
    %v749 = vlaneseq
    %v750 = vshrl.u32 %v749, 7
    %v751 = vsub.s32 %v748, %v750
    %v752 = vrot.slane %v745, %v751
    %753 = vrot.lane.b32.xlu0 %v752, 32
    %v754 = vpop.permute.xlu0 %753
    %s756 = scalar_lea.vmem [#allocation3], 4
    %757 = vst.msk [vmem:[%s756] sm:$0x1] %vm384, %v754
    %s758 = scalar_lea.vmem [#allocation2], 10
    %v759 = vld [vmem:[%s758] sm:$0x3]
    %760 = vrot.lane.b32.xlu0 %v737, 32
    %v761 = vpop.permute.xlu0 %760
    %v763 = vsel %vm296, %v761, 0
    %765 = vmatprep.subr.bf16.mxu0 0
    %766 = vmatpush1.bf16.msra.mxu0 0
    %767 = vmatprep.subr.bf16.mxu0 0
    %768 = vmatpush1.bf16.msra.mxu0 0
    %769 = vmatprep.subr.bf16.mxu0 0
    %770 = vmatpush1.bf16.msra.mxu0 0
    %771 = vmatprep.subr.bf16.mxu0 0
    %772 = vmatpush1.bf16.msra.mxu0 0
    %773 = vmatprep.subr.bf16.mxu0 0
    %774 = vmatpush1.bf16.msra.mxu0 0
    %775 = vmatprep.subr.bf16.mxu0 0
    %776 = vmatpush1.bf16.msra.mxu0 0
    %777 = vmatprep.subr.bf16.mxu0 0
    %778 = vmatpush1.bf16.msra.mxu0 %v294
    %779 = vmatprep.subr.bf16.mxu0 0
    %780 = vmatpush1.bf16.msra.mxu0 %v293
    %781 = vmatprep.subr.bf16.mxu0 0
    %782 = vmatpush2.bf16.msra.mxu0 0
    %783 = vmatprep.subr.bf16.mxu0 0
    %784 = vmatpush2.bf16.msra.mxu0 0
    %785 = vmatprep.subr.bf16.mxu0 0
    %786 = vmatpush2.bf16.msra.mxu0 0
    %787 = vmatprep.subr.bf16.mxu0 0
    %788 = vmatpush2.bf16.msra.mxu0 0
    %789 = vmatprep.subr.bf16.mxu0 0
    %790 = vmatpush2.bf16.msra.mxu0 0
    %791 = vmatprep.subr.bf16.mxu0 0
    %792 = vmatpush2.bf16.msra.mxu0 0
    %793 = vmatprep.subr.bf16.mxu0 0
    %794 = vmatpush2.bf16.msra.mxu0 0
    %795 = vmatprep.subr.bf16.mxu0 0
    %796 = vmatpush2.bf16.msra.mxu0 0
    %797 = vmatprep.mubr.bf16.mxu0 0
    %798 = vmatmul.mubr.bf16.gmra.mxu0 %v763
    %v799 = vpop.f32.mrf.mxu0
    %v800 = vadd.f32 0.0, %v799
    %v801 = vpop.f32.mrf.mxu0
    %v802 = vpop.f32.mrf.mxu0
    %v803 = vpop.f32.mrf.mxu0
    %804 = vdwg.mxu0
    %v805 = vadd.f32 %v759, %v800
    %v806 = vxor.u32 %v805, 2147483648
    %v807 = vmul.f32 %v806, 1.442695
    %v808 = vpow.pop %v807
    %v809 = vadd.f32 %v808, 1.0
    %v810 = vrcp.pop %v809
    %v811 = vmul.f32 1.0, %v810
    %v812 = vtanh.pop %v805
    %v813 = vmul.f32 %v811, %v730
    %815 = vrot.lane.b32.xlu0 %v812, 64
    %v816 = vpop.permute.xlu0 %815
    %v818 = vmul.f32 %v811, %v816
    %820 = vrot.lane.b32.xlu0 %v818, 32
    %v821 = vpop.permute.xlu0 %820
    %v823 = vadd.f32 %v813, %v821
    %v824 = vtanh.pop %v823
    %826 = vrot.lane.b32.xlu0 %v824, 64
    %v827 = vpop.permute.xlu0 %826
    %v829 = vmul.f32 %v811, %v827
    %v830 = vpack.c.bf16 %v829, %v829
    %v833 = vunpack.c.l.s4 1966171168
    %v834 = vunpack.c.0.s8 %v833
    %v835 = vlaneseq
    %v836 = vshrl.u32 %v835, 7
    %v837 = vsub.s32 %v834, %v836
    %v838 = vrot.slane %v830, %v837
    %v840 = vunpack.c.l.s4 1966171168
    %v841 = vunpack.c.0.s8 %v840
    %v842 = vlaneseq
    %v843 = vshrl.u32 %v842, 7
    %v844 = vsub.s32 %v841, %v843
    %v845 = vrot.slane %v838, %v844
    %846 = vrot.lane.b32.xlu0 %v845, 32
    %v847 = vpop.permute.xlu0 %846
    %s849 = scalar_lea.vmem [#allocation3], 5
    %850 = vst.msk [vmem:[%s849] sm:$0x1] %vm384, %v847
    %s851 = scalar_lea.vmem [#allocation2], 12
    %v852 = vld [vmem:[%s851] sm:$0x3]
    %853 = vrot.lane.b32.xlu0 %v830, 32
    %v854 = vpop.permute.xlu0 %853
    %v856 = vsel %vm296, %v854, 0
    %858 = vmatprep.subr.bf16.mxu0 0
    %859 = vmatpush1.bf16.msra.mxu0 0
    %860 = vmatprep.subr.bf16.mxu0 0
    %861 = vmatpush1.bf16.msra.mxu0 0
    %862 = vmatprep.subr.bf16.mxu0 0
    %863 = vmatpush1.bf16.msra.mxu0 0
    %864 = vmatprep.subr.bf16.mxu0 0
    %865 = vmatpush1.bf16.msra.mxu0 0
    %866 = vmatprep.subr.bf16.mxu0 0
    %867 = vmatpush1.bf16.msra.mxu0 0
    %868 = vmatprep.subr.bf16.mxu0 0
    %869 = vmatpush1.bf16.msra.mxu0 0
    %870 = vmatprep.subr.bf16.mxu0 0
    %871 = vmatpush1.bf16.msra.mxu0 %v294
    %872 = vmatprep.subr.bf16.mxu0 0
    %873 = vmatpush1.bf16.msra.mxu0 %v293
    %874 = vmatprep.subr.bf16.mxu0 0
    %875 = vmatpush2.bf16.msra.mxu0 0
    %876 = vmatprep.subr.bf16.mxu0 0
    %877 = vmatpush2.bf16.msra.mxu0 0
    %878 = vmatprep.subr.bf16.mxu0 0
    %879 = vmatpush2.bf16.msra.mxu0 0
    %880 = vmatprep.subr.bf16.mxu0 0
    %881 = vmatpush2.bf16.msra.mxu0 0
    %882 = vmatprep.subr.bf16.mxu0 0
    %883 = vmatpush2.bf16.msra.mxu0 0
    %884 = vmatprep.subr.bf16.mxu0 0
    %885 = vmatpush2.bf16.msra.mxu0 0
    %886 = vmatprep.subr.bf16.mxu0 0
    %887 = vmatpush2.bf16.msra.mxu0 0
    %888 = vmatprep.subr.bf16.mxu0 0
    %889 = vmatpush2.bf16.msra.mxu0 0
    %890 = vmatprep.mubr.bf16.mxu0 0
    %891 = vmatmul.mubr.bf16.gmra.mxu0 %v856
    %v892 = vpop.f32.mrf.mxu0
    %v893 = vadd.f32 0.0, %v892
    %v894 = vpop.f32.mrf.mxu0
    %v895 = vpop.f32.mrf.mxu0
    %v896 = vpop.f32.mrf.mxu0
    %897 = vdwg.mxu0
    %v898 = vadd.f32 %v852, %v893
    %v899 = vxor.u32 %v898, 2147483648
    %v900 = vmul.f32 %v899, 1.442695
    %v901 = vpow.pop %v900
    %v902 = vadd.f32 %v901, 1.0
    %v903 = vrcp.pop %v902
    %v904 = vmul.f32 1.0, %v903
    %v905 = vtanh.pop %v898
    %v906 = vmul.f32 %v904, %v823
    %908 = vrot.lane.b32.xlu0 %v905, 64
    %v909 = vpop.permute.xlu0 %908
    %v911 = vmul.f32 %v904, %v909
    %913 = vrot.lane.b32.xlu0 %v911, 32
    %v914 = vpop.permute.xlu0 %913
    %v916 = vadd.f32 %v906, %v914
    %v917 = vtanh.pop %v916
    %919 = vrot.lane.b32.xlu0 %v917, 64
    %v920 = vpop.permute.xlu0 %919
    %v922 = vmul.f32 %v904, %v920
    %v923 = vpack.c.bf16 %v922, %v922
    %v926 = vunpack.c.l.s4 1966171168
    %v927 = vunpack.c.0.s8 %v926
    %v928 = vlaneseq
    %v929 = vshrl.u32 %v928, 7
    %v930 = vsub.s32 %v927, %v929
    %v931 = vrot.slane %v923, %v930
    %v933 = vunpack.c.l.s4 1966171168
    %v934 = vunpack.c.0.s8 %v933
    %v935 = vlaneseq
    %v936 = vshrl.u32 %v935, 7
    %v937 = vsub.s32 %v934, %v936
    %v938 = vrot.slane %v931, %v937
    %939 = vrot.lane.b32.xlu0 %v938, 32
    %v940 = vpop.permute.xlu0 %939
    %s942 = scalar_lea.vmem [#allocation3], 6
    %943 = vst.msk [vmem:[%s942] sm:$0x1] %vm384, %v940
    %s944 = scalar_lea.vmem [#allocation2], 14
    %v945 = vld [vmem:[%s944] sm:$0x3]
    %946 = vrot.lane.b32.xlu0 %v923, 32
    %v947 = vpop.permute.xlu0 %946
    %v949 = vsel %vm296, %v947, 0
    %951 = vmatprep.subr.bf16.mxu0 0
    %952 = vmatpush1.bf16.msra.mxu0 0
    %953 = vmatprep.subr.bf16.mxu0 0
    %954 = vmatpush1.bf16.msra.mxu0 0
    %955 = vmatprep.subr.bf16.mxu0 0
    %956 = vmatpush1.bf16.msra.mxu0 0
    %957 = vmatprep.subr.bf16.mxu0 0
    %958 = vmatpush1.bf16.msra.mxu0 0
    %959 = vmatprep.subr.bf16.mxu0 0
    %960 = vmatpush1.bf16.msra.mxu0 0
    %961 = vmatprep.subr.bf16.mxu0 0
    %962 = vmatpush1.bf16.msra.mxu0 0
    %963 = vmatprep.subr.bf16.mxu0 0
    %964 = vmatpush1.bf16.msra.mxu0 %v294
    %965 = vmatprep.subr.bf16.mxu0 0
    %966 = vmatpush1.bf16.msra.mxu0 %v293
    %967 = vmatprep.subr.bf16.mxu0 0
    %968 = vmatpush2.bf16.msra.mxu0 0
    %969 = vmatprep.subr.bf16.mxu0 0
    %970 = vmatpush2.bf16.msra.mxu0 0
    %971 = vmatprep.subr.bf16.mxu0 0
    %972 = vmatpush2.bf16.msra.mxu0 0
    %973 = vmatprep.subr.bf16.mxu0 0
    %974 = vmatpush2.bf16.msra.mxu0 0
    %975 = vmatprep.subr.bf16.mxu0 0
    %976 = vmatpush2.bf16.msra.mxu0 0
    %977 = vmatprep.subr.bf16.mxu0 0
    %978 = vmatpush2.bf16.msra.mxu0 0
    %979 = vmatprep.subr.bf16.mxu0 0
    %980 = vmatpush2.bf16.msra.mxu0 0
    %981 = vmatprep.subr.bf16.mxu0 0
    %982 = vmatpush2.bf16.msra.mxu0 0
    %983 = vmatprep.mubr.bf16.mxu0 0
    %984 = vmatmul.mubr.bf16.gmra.mxu0 %v949
    %v985 = vpop.f32.mrf.mxu0
    %v986 = vadd.f32 0.0, %v985
    %v987 = vpop.f32.mrf.mxu0
    %v988 = vpop.f32.mrf.mxu0
    %v989 = vpop.f32.mrf.mxu0
    %990 = vdwg.mxu0
    %v991 = vadd.f32 %v945, %v986
    %v992 = vxor.u32 %v991, 2147483648
    %v993 = vmul.f32 %v992, 1.442695
    %v994 = vpow.pop %v993
    %v995 = vadd.f32 %v994, 1.0
    %v996 = vrcp.pop %v995
    %v997 = vmul.f32 1.0, %v996
    %v998 = vtanh.pop %v991
    %v999 = vmul.f32 %v997, %v916
    %1001 = vrot.lane.b32.xlu0 %v998, 64
    %v1002 = vpop.permute.xlu0 %1001
    %v1004 = vmul.f32 %v997, %v1002
    %1006 = vrot.lane.b32.xlu0 %v1004, 32
    %v1007 = vpop.permute.xlu0 %1006
    %v1009 = vadd.f32 %v999, %v1007
    %v1010 = vtanh.pop %v1009
    %1012 = vrot.lane.b32.xlu0 %v1010, 64
    %v1013 = vpop.permute.xlu0 %1012
    %v1015 = vmul.f32 %v997, %v1013
    %v1016 = vpack.c.bf16 %v1015, %v1015
    %v1019 = vunpack.c.l.s4 1966171168
    %v1020 = vunpack.c.0.s8 %v1019
    %v1021 = vlaneseq
    %v1022 = vshrl.u32 %v1021, 7
    %v1023 = vsub.s32 %v1020, %v1022
    %v1024 = vrot.slane %v1016, %v1023
    %v1026 = vunpack.c.l.s4 1966171168
    %v1027 = vunpack.c.0.s8 %v1026
    %v1028 = vlaneseq
    %v1029 = vshrl.u32 %v1028, 7
    %v1030 = vsub.s32 %v1027, %v1029
    %v1031 = vrot.slane %v1024, %v1030
    %1032 = vrot.lane.b32.xlu0 %v1031, 32
    %v1033 = vpop.permute.xlu0 %1032
    %s1035 = scalar_lea.vmem [#allocation3], 7
    %1036 = vst.msk [vmem:[%s1035] sm:$0x1] %vm384, %v1033
    %v1037 = vld [vmem:[#allocation3] sm:$0x1]
    %v1038 = vld [vmem:[#allocation3 + $0x1] sm:$0x1]
    %v1039 = vld [vmem:[#allocation3 + $0x2] sm:$0x1]
    %v1040 = vld [vmem:[#allocation3 + $0x3] sm:$0x1]
    %v1041 = vld [vmem:[#allocation3 + $0x4] sm:$0x1]
    %v1042 = vld [vmem:[#allocation3 + $0x5] sm:$0x1]
    %v1043 = vld [vmem:[#allocation3 + $0x6] sm:$0x1]
    %v1044 = vld [vmem:[#allocation3 + $0x7] sm:$0x1]
    %v1045 = vld [vmem:[#allocation7] sm:$0xff]
    %v1046 = vld [vmem:[#allocation7 + $0x8] sm:$0xff]
    %v1047 = vld [vmem:[#allocation7 + $0x10] sm:$0xff]
    %v1048 = vld [vmem:[#allocation7 + $0x18] sm:$0xff]
    %v1049 = vpack.c.bf16 %v1046, %v1045
    %v1050 = vpack.c.bf16 %v1048, %v1047
    %v1059 = vcombine.low %v1037, %v1038
    %v1060 = vcombine.low %v1039, %v1040
    %v1061 = vcombine.low %v1041, %v1042
    %v1062 = vcombine.low %v1043, %v1044
    %v1064 = vunpack.c.l.s4 1966171168
    %v1065 = vunpack.c.0.s8 %v1064
    %v1066 = vlaneseq
    %v1067 = vshrl.u32 %v1066, 7
    %v1068 = vsub.s32 %v1065, %v1067
    %v1069 = vrot.slane %v1059, %v1068
    %v1071 = vunpack.c.l.s4 1966171168
    %v1072 = vunpack.c.0.s8 %v1071
    %v1073 = vlaneseq
    %v1074 = vshrl.u32 %v1073, 7
    %v1075 = vsub.s32 %v1072, %v1074
    %v1076 = vrot.slane %v1060, %v1075
    %v1078 = vunpack.c.l.s4 1966171168
    %v1079 = vunpack.c.0.s8 %v1078
    %v1080 = vlaneseq
    %v1081 = vshrl.u32 %v1080, 7
    %v1082 = vsub.s32 %v1079, %v1081
    %v1083 = vrot.slane %v1061, %v1082
    %v1085 = vunpack.c.l.s4 1966171168
    %v1086 = vunpack.c.0.s8 %v1085
    %v1087 = vlaneseq
    %v1088 = vshrl.u32 %v1087, 7
    %v1089 = vsub.s32 %v1086, %v1088
    %v1090 = vrot.slane %v1062, %v1089
    %v1091 = vcombine.low %v1069, %v1076
    %v1092 = vcombine.low %v1083, %v1090
    %v1094 = vunpack.c.l.s4 1966171168
    %v1095 = vunpack.c.0.s8 %v1094
    %v1096 = vlaneseq
    %v1097 = vshrl.u32 %v1096, 7
    %v1098 = vsub.s32 %v1095, %v1097
    %v1099 = vrot.slane %v1091, %v1098
    %v1101 = vunpack.c.l.s4 1966171168
    %v1102 = vunpack.c.0.s8 %v1101
    %v1103 = vlaneseq
    %v1104 = vshrl.u32 %v1103, 7
    %v1105 = vsub.s32 %v1102, %v1104
    %v1106 = vrot.slane %v1092, %v1105
    %v1107 = vcombine.low %v1099, %v1106
    %v1109 = vsel %vm296, %v1107, 0
    %1111 = vmatprep.subr.bf16.mxu0 0
    %1112 = vmatpush1.bf16.msra.mxu0 0
    %1113 = vmatprep.subr.bf16.mxu0 0
    %1114 = vmatpush1.bf16.msra.mxu0 0
    %1115 = vmatprep.subr.bf16.mxu0 0
    %1116 = vmatpush1.bf16.msra.mxu0 0
    %1117 = vmatprep.subr.bf16.mxu0 0
    %1118 = vmatpush1.bf16.msra.mxu0 0
    %1119 = vmatprep.subr.bf16.mxu0 0
    %1120 = vmatpush1.bf16.msra.mxu0 0
    %1121 = vmatprep.subr.bf16.mxu0 0
    %1122 = vmatpush1.bf16.msra.mxu0 0
    %1123 = vmatprep.subr.bf16.mxu0 0
    %1124 = vmatpush1.bf16.msra.mxu0 %v1050
    %1125 = vmatprep.subr.bf16.mxu0 0
    %1126 = vmatpush1.bf16.msra.mxu0 %v1049
    %1127 = vmatprep.subr.bf16.mxu0 0
    %1128 = vmatpush2.bf16.msra.mxu0 0
    %1129 = vmatprep.subr.bf16.mxu0 0
    %1130 = vmatpush2.bf16.msra.mxu0 0
    %1131 = vmatprep.subr.bf16.mxu0 0
    %1132 = vmatpush2.bf16.msra.mxu0 0
    %1133 = vmatprep.subr.bf16.mxu0 0
    %1134 = vmatpush2.bf16.msra.mxu0 0
    %1135 = vmatprep.subr.bf16.mxu0 0
    %1136 = vmatpush2.bf16.msra.mxu0 0
    %1137 = vmatprep.subr.bf16.mxu0 0
    %1138 = vmatpush2.bf16.msra.mxu0 0
    %1139 = vmatprep.subr.bf16.mxu0 0
    %1140 = vmatpush2.bf16.msra.mxu0 0
    %1141 = vmatprep.subr.bf16.mxu0 0
    %1142 = vmatpush2.bf16.msra.mxu0 0
    %1143 = vmatprep.mubr.bf16.mxu0 0
    %1144 = vmatmul.mubr.bf16.gmra.mxu0 %v1109
    %v1145 = vpop.f32.mrf.mxu0
    %v1146 = vadd.f32 0.0, %v1145
    %v1147 = vpop.f32.mrf.mxu0
    %v1148 = vpop.f32.mrf.mxu0
    %v1149 = vadd.f32 0.0, %v1148
    %v1150 = vpop.f32.mrf.mxu0
    %1151 = vdwg.mxu0
    %v1154 = vcombine.high %v1146, %v1146
    %v1156 = vunpack.c.l.s4 1983009808
    %v1157 = vunpack.c.0.s8 %v1156
    %v1158 = vlaneseq
    %v1159 = vshrl.u32 %v1158, 7
    %v1160 = vsub.s32 %v1157, %v1159
    %v1161 = vrot.slane %v1146, %v1160
    %v1163 = vunpack.c.l.s4 1983009808
    %v1164 = vunpack.c.0.s8 %v1163
    %v1165 = vlaneseq
    %v1166 = vshrl.u32 %v1165, 7
    %v1167 = vsub.s32 %v1164, %v1166
    %v1168 = vrot.slane %v1154, %v1167
    %v1169 = vcombine.high %v1161, %v1161
    %v1170 = vcombine.high %v1168, %v1168
    %v1171 = vcombine.high %v1149, %v1149
    %v1173 = vunpack.c.l.s4 1983009808
    %v1174 = vunpack.c.0.s8 %v1173
    %v1175 = vlaneseq
    %v1176 = vshrl.u32 %v1175, 7
    %v1177 = vsub.s32 %v1174, %v1176
    %v1178 = vrot.slane %v1149, %v1177
    %v1180 = vunpack.c.l.s4 1983009808
    %v1181 = vunpack.c.0.s8 %v1180
    %v1182 = vlaneseq
    %v1183 = vshrl.u32 %v1182, 7
    %v1184 = vsub.s32 %v1181, %v1183
    %v1185 = vrot.slane %v1171, %v1184
    %v1186 = vcombine.high %v1178, %v1178
    %v1187 = vcombine.high %v1185, %v1185
    %v1196 = vld [vmem:[%s6] sm:$0x1]
    %v1198 = vlaneseq
    %v1199 = vshrl.u32 %v1198, 7
    %v1200 = vsub.s32 0, %v1199
    %v1201 = vrot.slane %v1196, %v1200
    %v1203 = vadd.f32 %v1161, %v1201
    %v1204 = vadd.f32 %v1169, %v1201
    %v1205 = vadd.f32 %v1168, %v1201
    %v1206 = vadd.f32 %v1170, %v1201
    %v1207 = vadd.f32 %v1178, %v1201
    %v1208 = vadd.f32 %v1186, %v1201
    %v1209 = vadd.f32 %v1185, %v1201
    %v1210 = vadd.f32 %v1187, %v1201
    %1211 = vst [vmem:[#allocation2] sm:$0x3] %v1203
    %1212 = vst [vmem:[#allocation2 + $0x2] sm:$0x3] %v1204
    %1213 = vst [vmem:[#allocation2 + $0x4] sm:$0x3] %v1205
    %1214 = vst [vmem:[#allocation2 + $0x6] sm:$0x3] %v1206
    %1215 = vst [vmem:[#allocation2 + $0x8] sm:$0x3] %v1207
    %1216 = vst [vmem:[#allocation2 + $0xa] sm:$0x3] %v1208
    %1217 = vst [vmem:[#allocation2 + $0xc] sm:$0x3] %v1209
    %1218 = vst [vmem:[#allocation2 + $0xe] sm:$0x3] %v1210
    %v1219 = vld [vmem:[#allocation9] sm:$0xff]
    %v1220 = vld [vmem:[#allocation9 + $0x8] sm:$0xff]
    %v1221 = vld [vmem:[#allocation9 + $0x10] sm:$0xff]
    %v1222 = vld [vmem:[#allocation9 + $0x18] sm:$0xff]
    %v1223 = vpack.c.bf16 %v1220, %v1219
    %v1224 = vpack.c.bf16 %v1222, %v1221
    %v1225 = vld [vmem:[#allocation2] sm:$0x3]
    %1226 = vmatprep.subr.bf16.mxu0 0
    %1227 = vmatpush1.bf16.msra.mxu0 0
    %1228 = vmatprep.subr.bf16.mxu0 0
    %1229 = vmatpush1.bf16.msra.mxu0 0
    %1230 = vmatprep.subr.bf16.mxu0 0
    %1231 = vmatpush1.bf16.msra.mxu0 0
    %1232 = vmatprep.subr.bf16.mxu0 0
    %1233 = vmatpush1.bf16.msra.mxu0 0
    %1234 = vmatprep.subr.bf16.mxu0 0
    %1235 = vmatpush1.bf16.msra.mxu0 0
    %1236 = vmatprep.subr.bf16.mxu0 0
    %1237 = vmatpush1.bf16.msra.mxu0 0
    %1238 = vmatprep.subr.bf16.mxu0 0
    %1239 = vmatpush1.bf16.msra.mxu0 %v1224
    %1240 = vmatprep.subr.bf16.mxu0 0
    %1241 = vmatpush1.bf16.msra.mxu0 %v1223
    %1242 = vmatprep.subr.bf16.mxu0 0
    %1243 = vmatpush2.bf16.msra.mxu0 0
    %1244 = vmatprep.subr.bf16.mxu0 0
    %1245 = vmatpush2.bf16.msra.mxu0 0
    %1246 = vmatprep.subr.bf16.mxu0 0
    %1247 = vmatpush2.bf16.msra.mxu0 0
    %1248 = vmatprep.subr.bf16.mxu0 0
    %1249 = vmatpush2.bf16.msra.mxu0 0
    %1250 = vmatprep.subr.bf16.mxu0 0
    %1251 = vmatpush2.bf16.msra.mxu0 0
    %1252 = vmatprep.subr.bf16.mxu0 0
    %1253 = vmatpush2.bf16.msra.mxu0 0
    %1254 = vmatprep.subr.bf16.mxu0 0
    %1255 = vmatpush2.bf16.msra.mxu0 0
    %1256 = vmatprep.subr.bf16.mxu0 0
    %1257 = vmatpush2.bf16.msra.mxu0 0
    %1258 = vmatprep.mubr.bf16.mxu0 0
    %1259 = vmatmul.mubr.bf16.gmra.mxu0 %v298
    %v1260 = vpop.f32.mrf.mxu0
    %v1261 = vadd.f32 0.0, %v1260
    %v1262 = vpop.f32.mrf.mxu0
    %v1263 = vpop.f32.mrf.mxu0
    %v1264 = vpop.f32.mrf.mxu0
    %1265 = vdwg.mxu0
    %v1266 = vadd.f32 %v1225, %v1261
    %v1267 = vxor.u32 %v1266, 2147483648
    %v1268 = vmul.f32 %v1267, 1.442695
    %v1269 = vpow.pop %v1268
    %v1270 = vadd.f32 %v1269, 1.0
    %v1271 = vrcp.pop %v1270
    %v1272 = vmul.f32 1.0, %v1271
    %v1273 = vtanh.pop %v1266
    %v1274 = vmul.f32 %v1272, 0.0
    %1276 = vrot.lane.b32.xlu0 %v1273, 64
    %v1277 = vpop.permute.xlu0 %1276
    %v1279 = vmul.f32 %v1272, %v1277
    %1281 = vrot.lane.b32.xlu0 %v1279, 32
    %v1282 = vpop.permute.xlu0 %1281
    %v1284 = vadd.f32 %v1274, %v1282
    %v1285 = vtanh.pop %v1284
    %1287 = vrot.lane.b32.xlu0 %v1285, 64
    %v1288 = vpop.permute.xlu0 %1287
    %v1290 = vmul.f32 %v1272, %v1288
    %v1291 = vld [vmem:[%s386] sm:$0x3]
    %v1292 = vpack.c.bf16 %v1290, %v1290
    %1294 = vrot.lane.b32.xlu0 %v1292, 32
    %v1295 = vpop.permute.xlu0 %1294
    %v1297 = vsel %vm296, %v1295, 0
    %1299 = vmatprep.subr.bf16.mxu0 0
    %1300 = vmatpush1.bf16.msra.mxu0 0
    %1301 = vmatprep.subr.bf16.mxu0 0
    %1302 = vmatpush1.bf16.msra.mxu0 0
    %1303 = vmatprep.subr.bf16.mxu0 0
    %1304 = vmatpush1.bf16.msra.mxu0 0
    %1305 = vmatprep.subr.bf16.mxu0 0
    %1306 = vmatpush1.bf16.msra.mxu0 0
    %1307 = vmatprep.subr.bf16.mxu0 0
    %1308 = vmatpush1.bf16.msra.mxu0 0
    %1309 = vmatprep.subr.bf16.mxu0 0
    %1310 = vmatpush1.bf16.msra.mxu0 0
    %1311 = vmatprep.subr.bf16.mxu0 0
    %1312 = vmatpush1.bf16.msra.mxu0 %v1224
    %1313 = vmatprep.subr.bf16.mxu0 0
    %1314 = vmatpush1.bf16.msra.mxu0 %v1223
    %1315 = vmatprep.subr.bf16.mxu0 0
    %1316 = vmatpush2.bf16.msra.mxu0 0
    %1317 = vmatprep.subr.bf16.mxu0 0
    %1318 = vmatpush2.bf16.msra.mxu0 0
    %1319 = vmatprep.subr.bf16.mxu0 0
    %1320 = vmatpush2.bf16.msra.mxu0 0
    %1321 = vmatprep.subr.bf16.mxu0 0
    %1322 = vmatpush2.bf16.msra.mxu0 0
    %1323 = vmatprep.subr.bf16.mxu0 0
    %1324 = vmatpush2.bf16.msra.mxu0 0
    %1325 = vmatprep.subr.bf16.mxu0 0
    %1326 = vmatpush2.bf16.msra.mxu0 0
    %1327 = vmatprep.subr.bf16.mxu0 0
    %1328 = vmatpush2.bf16.msra.mxu0 0
    %1329 = vmatprep.subr.bf16.mxu0 0
    %1330 = vmatpush2.bf16.msra.mxu0 0
    %1331 = vmatprep.mubr.bf16.mxu0 0
    %1332 = vmatmul.mubr.bf16.gmra.mxu0 %v1297
    %v1333 = vpop.f32.mrf.mxu0
    %v1334 = vadd.f32 0.0, %v1333
    %v1335 = vpop.f32.mrf.mxu0
    %v1336 = vpop.f32.mrf.mxu0
    %v1337 = vpop.f32.mrf.mxu0
    %1338 = vdwg.mxu0
    %v1339 = vadd.f32 %v1291, %v1334
    %v1340 = vxor.u32 %v1339, 2147483648
    %v1341 = vmul.f32 %v1340, 1.442695
    %v1342 = vpow.pop %v1341
    %v1343 = vadd.f32 %v1342, 1.0
    %v1344 = vrcp.pop %v1343
    %v1345 = vmul.f32 1.0, %v1344
    %v1346 = vtanh.pop %v1339
    %v1347 = vmul.f32 %v1345, %v1284
    %1349 = vrot.lane.b32.xlu0 %v1346, 64
    %v1350 = vpop.permute.xlu0 %1349
    %v1352 = vmul.f32 %v1345, %v1350
    %1354 = vrot.lane.b32.xlu0 %v1352, 32
    %v1355 = vpop.permute.xlu0 %1354
    %v1357 = vadd.f32 %v1347, %v1355
    %v1358 = vtanh.pop %v1357
    %1360 = vrot.lane.b32.xlu0 %v1358, 64
    %v1361 = vpop.permute.xlu0 %1360
    %v1363 = vmul.f32 %v1345, %v1361
    %v1364 = vld [vmem:[%s479] sm:$0x3]
    %v1365 = vpack.c.bf16 %v1363, %v1363
    %1367 = vrot.lane.b32.xlu0 %v1365, 32
    %v1368 = vpop.permute.xlu0 %1367
    %v1370 = vsel %vm296, %v1368, 0
    %1372 = vmatprep.subr.bf16.mxu0 0
    %1373 = vmatpush1.bf16.msra.mxu0 0
    %1374 = vmatprep.subr.bf16.mxu0 0
    %1375 = vmatpush1.bf16.msra.mxu0 0
    %1376 = vmatprep.subr.bf16.mxu0 0
    %1377 = vmatpush1.bf16.msra.mxu0 0
    %1378 = vmatprep.subr.bf16.mxu0 0
    %1379 = vmatpush1.bf16.msra.mxu0 0
    %1380 = vmatprep.subr.bf16.mxu0 0
    %1381 = vmatpush1.bf16.msra.mxu0 0
    %1382 = vmatprep.subr.bf16.mxu0 0
    %1383 = vmatpush1.bf16.msra.mxu0 0
    %1384 = vmatprep.subr.bf16.mxu0 0
    %1385 = vmatpush1.bf16.msra.mxu0 %v1224
    %1386 = vmatprep.subr.bf16.mxu0 0
    %1387 = vmatpush1.bf16.msra.mxu0 %v1223
    %1388 = vmatprep.subr.bf16.mxu0 0
    %1389 = vmatpush2.bf16.msra.mxu0 0
    %1390 = vmatprep.subr.bf16.mxu0 0
    %1391 = vmatpush2.bf16.msra.mxu0 0
    %1392 = vmatprep.subr.bf16.mxu0 0
    %1393 = vmatpush2.bf16.msra.mxu0 0
    %1394 = vmatprep.subr.bf16.mxu0 0
    %1395 = vmatpush2.bf16.msra.mxu0 0
    %1396 = vmatprep.subr.bf16.mxu0 0
    %1397 = vmatpush2.bf16.msra.mxu0 0
    %1398 = vmatprep.subr.bf16.mxu0 0
    %1399 = vmatpush2.bf16.msra.mxu0 0
    %1400 = vmatprep.subr.bf16.mxu0 0
    %1401 = vmatpush2.bf16.msra.mxu0 0
    %1402 = vmatprep.subr.bf16.mxu0 0
    %1403 = vmatpush2.bf16.msra.mxu0 0
    %1404 = vmatprep.mubr.bf16.mxu0 0
    %1405 = vmatmul.mubr.bf16.gmra.mxu0 %v1370
    %v1406 = vpop.f32.mrf.mxu0
    %v1407 = vadd.f32 0.0, %v1406
    %v1408 = vpop.f32.mrf.mxu0
    %v1409 = vpop.f32.mrf.mxu0
    %v1410 = vpop.f32.mrf.mxu0
    %1411 = vdwg.mxu0
    %v1412 = vadd.f32 %v1364, %v1407
    %v1413 = vxor.u32 %v1412, 2147483648
    %v1414 = vmul.f32 %v1413, 1.442695
    %v1415 = vpow.pop %v1414
    %v1416 = vadd.f32 %v1415, 1.0
    %v1417 = vrcp.pop %v1416
    %v1418 = vmul.f32 1.0, %v1417
    %v1419 = vtanh.pop %v1412
    %v1420 = vmul.f32 %v1418, %v1357
    %1422 = vrot.lane.b32.xlu0 %v1419, 64
    %v1423 = vpop.permute.xlu0 %1422
    %v1425 = vmul.f32 %v1418, %v1423
    %1427 = vrot.lane.b32.xlu0 %v1425, 32
    %v1428 = vpop.permute.xlu0 %1427
    %v1430 = vadd.f32 %v1420, %v1428
    %v1431 = vtanh.pop %v1430
    %1433 = vrot.lane.b32.xlu0 %v1431, 64
    %v1434 = vpop.permute.xlu0 %1433
    %v1436 = vmul.f32 %v1418, %v1434
    %v1437 = vld [vmem:[%s572] sm:$0x3]
    %v1438 = vpack.c.bf16 %v1436, %v1436
    %1440 = vrot.lane.b32.xlu0 %v1438, 32
    %v1441 = vpop.permute.xlu0 %1440
    %v1443 = vsel %vm296, %v1441, 0
    %1445 = vmatprep.subr.bf16.mxu0 0
    %1446 = vmatpush1.bf16.msra.mxu0 0
    %1447 = vmatprep.subr.bf16.mxu0 0
    %1448 = vmatpush1.bf16.msra.mxu0 0
    %1449 = vmatprep.subr.bf16.mxu0 0
    %1450 = vmatpush1.bf16.msra.mxu0 0
    %1451 = vmatprep.subr.bf16.mxu0 0
    %1452 = vmatpush1.bf16.msra.mxu0 0
    %1453 = vmatprep.subr.bf16.mxu0 0
    %1454 = vmatpush1.bf16.msra.mxu0 0
    %1455 = vmatprep.subr.bf16.mxu0 0
    %1456 = vmatpush1.bf16.msra.mxu0 0
    %1457 = vmatprep.subr.bf16.mxu0 0
    %1458 = vmatpush1.bf16.msra.mxu0 %v1224
    %1459 = vmatprep.subr.bf16.mxu0 0
    %1460 = vmatpush1.bf16.msra.mxu0 %v1223
    %1461 = vmatprep.subr.bf16.mxu0 0
    %1462 = vmatpush2.bf16.msra.mxu0 0
    %1463 = vmatprep.subr.bf16.mxu0 0
    %1464 = vmatpush2.bf16.msra.mxu0 0
    %1465 = vmatprep.subr.bf16.mxu0 0
    %1466 = vmatpush2.bf16.msra.mxu0 0
    %1467 = vmatprep.subr.bf16.mxu0 0
    %1468 = vmatpush2.bf16.msra.mxu0 0
    %1469 = vmatprep.subr.bf16.mxu0 0
    %1470 = vmatpush2.bf16.msra.mxu0 0
    %1471 = vmatprep.subr.bf16.mxu0 0
    %1472 = vmatpush2.bf16.msra.mxu0 0
    %1473 = vmatprep.subr.bf16.mxu0 0
    %1474 = vmatpush2.bf16.msra.mxu0 0
    %1475 = vmatprep.subr.bf16.mxu0 0
    %1476 = vmatpush2.bf16.msra.mxu0 0
    %1477 = vmatprep.mubr.bf16.mxu0 0
    %1478 = vmatmul.mubr.bf16.gmra.mxu0 %v1443
    %v1479 = vpop.f32.mrf.mxu0
    %v1480 = vadd.f32 0.0, %v1479
    %v1481 = vpop.f32.mrf.mxu0
    %v1482 = vpop.f32.mrf.mxu0
    %v1483 = vpop.f32.mrf.mxu0
    %1484 = vdwg.mxu0
    %v1485 = vadd.f32 %v1437, %v1480
    %v1486 = vxor.u32 %v1485, 2147483648
    %v1487 = vmul.f32 %v1486, 1.442695
    %v1488 = vpow.pop %v1487
    %v1489 = vadd.f32 %v1488, 1.0
    %v1490 = vrcp.pop %v1489
    %v1491 = vmul.f32 1.0, %v1490
    %v1492 = vtanh.pop %v1485
    %v1493 = vmul.f32 %v1491, %v1430
    %1495 = vrot.lane.b32.xlu0 %v1492, 64
    %v1496 = vpop.permute.xlu0 %1495
    %v1498 = vmul.f32 %v1491, %v1496
    %1500 = vrot.lane.b32.xlu0 %v1498, 32
    %v1501 = vpop.permute.xlu0 %1500
    %v1503 = vadd.f32 %v1493, %v1501
    %v1504 = vtanh.pop %v1503
    %1506 = vrot.lane.b32.xlu0 %v1504, 64
    %v1507 = vpop.permute.xlu0 %1506
    %v1509 = vmul.f32 %v1491, %v1507
    %v1510 = vld [vmem:[%s665] sm:$0x3]
    %v1511 = vpack.c.bf16 %v1509, %v1509
    %1513 = vrot.lane.b32.xlu0 %v1511, 32
    %v1514 = vpop.permute.xlu0 %1513
    %v1516 = vsel %vm296, %v1514, 0
    %1518 = vmatprep.subr.bf16.mxu0 0
    %1519 = vmatpush1.bf16.msra.mxu0 0
    %1520 = vmatprep.subr.bf16.mxu0 0
    %1521 = vmatpush1.bf16.msra.mxu0 0
    %1522 = vmatprep.subr.bf16.mxu0 0
    %1523 = vmatpush1.bf16.msra.mxu0 0
    %1524 = vmatprep.subr.bf16.mxu0 0
    %1525 = vmatpush1.bf16.msra.mxu0 0
    %1526 = vmatprep.subr.bf16.mxu0 0
    %1527 = vmatpush1.bf16.msra.mxu0 0
    %1528 = vmatprep.subr.bf16.mxu0 0
    %1529 = vmatpush1.bf16.msra.mxu0 0
    %1530 = vmatprep.subr.bf16.mxu0 0
    %1531 = vmatpush1.bf16.msra.mxu0 %v1224
    %1532 = vmatprep.subr.bf16.mxu0 0
    %1533 = vmatpush1.bf16.msra.mxu0 %v1223
    %1534 = vmatprep.subr.bf16.mxu0 0
    %1535 = vmatpush2.bf16.msra.mxu0 0
    %1536 = vmatprep.subr.bf16.mxu0 0
    %1537 = vmatpush2.bf16.msra.mxu0 0
    %1538 = vmatprep.subr.bf16.mxu0 0
    %1539 = vmatpush2.bf16.msra.mxu0 0
    %1540 = vmatprep.subr.bf16.mxu0 0
    %1541 = vmatpush2.bf16.msra.mxu0 0
    %1542 = vmatprep.subr.bf16.mxu0 0
    %1543 = vmatpush2.bf16.msra.mxu0 0
    %1544 = vmatprep.subr.bf16.mxu0 0
    %1545 = vmatpush2.bf16.msra.mxu0 0
    %1546 = vmatprep.subr.bf16.mxu0 0
    %1547 = vmatpush2.bf16.msra.mxu0 0
    %1548 = vmatprep.subr.bf16.mxu0 0
    %1549 = vmatpush2.bf16.msra.mxu0 0
    %1550 = vmatprep.mubr.bf16.mxu0 0
    %1551 = vmatmul.mubr.bf16.gmra.mxu0 %v1516
    %v1552 = vpop.f32.mrf.mxu0
    %v1553 = vadd.f32 0.0, %v1552
    %v1554 = vpop.f32.mrf.mxu0
    %v1555 = vpop.f32.mrf.mxu0
    %v1556 = vpop.f32.mrf.mxu0
    %1557 = vdwg.mxu0
    %v1558 = vadd.f32 %v1510, %v1553
    %v1559 = vxor.u32 %v1558, 2147483648
    %v1560 = vmul.f32 %v1559, 1.442695
    %v1561 = vpow.pop %v1560
    %v1562 = vadd.f32 %v1561, 1.0
    %v1563 = vrcp.pop %v1562
    %v1564 = vmul.f32 1.0, %v1563
    %v1565 = vtanh.pop %v1558
    %v1566 = vmul.f32 %v1564, %v1503
    %1568 = vrot.lane.b32.xlu0 %v1565, 64
    %v1569 = vpop.permute.xlu0 %1568
    %v1571 = vmul.f32 %v1564, %v1569
    %1573 = vrot.lane.b32.xlu0 %v1571, 32
    %v1574 = vpop.permute.xlu0 %1573
    %v1576 = vadd.f32 %v1566, %v1574
    %v1577 = vtanh.pop %v1576
    %1579 = vrot.lane.b32.xlu0 %v1577, 64
    %v1580 = vpop.permute.xlu0 %1579
    %v1582 = vmul.f32 %v1564, %v1580
    %v1583 = vld [vmem:[%s758] sm:$0x3]
    %v1584 = vpack.c.bf16 %v1582, %v1582
    %1586 = vrot.lane.b32.xlu0 %v1584, 32
    %v1587 = vpop.permute.xlu0 %1586
    %v1589 = vsel %vm296, %v1587, 0
    %1591 = vmatprep.subr.bf16.mxu0 0
    %1592 = vmatpush1.bf16.msra.mxu0 0
    %1593 = vmatprep.subr.bf16.mxu0 0
    %1594 = vmatpush1.bf16.msra.mxu0 0
    %1595 = vmatprep.subr.bf16.mxu0 0
    %1596 = vmatpush1.bf16.msra.mxu0 0
    %1597 = vmatprep.subr.bf16.mxu0 0
    %1598 = vmatpush1.bf16.msra.mxu0 0
    %1599 = vmatprep.subr.bf16.mxu0 0
    %1600 = vmatpush1.bf16.msra.mxu0 0
    %1601 = vmatprep.subr.bf16.mxu0 0
    %1602 = vmatpush1.bf16.msra.mxu0 0
    %1603 = vmatprep.subr.bf16.mxu0 0
    %1604 = vmatpush1.bf16.msra.mxu0 %v1224
    %1605 = vmatprep.subr.bf16.mxu0 0
    %1606 = vmatpush1.bf16.msra.mxu0 %v1223
    %1607 = vmatprep.subr.bf16.mxu0 0
    %1608 = vmatpush2.bf16.msra.mxu0 0
    %1609 = vmatprep.subr.bf16.mxu0 0
    %1610 = vmatpush2.bf16.msra.mxu0 0
    %1611 = vmatprep.subr.bf16.mxu0 0
    %1612 = vmatpush2.bf16.msra.mxu0 0
    %1613 = vmatprep.subr.bf16.mxu0 0
    %1614 = vmatpush2.bf16.msra.mxu0 0
    %1615 = vmatprep.subr.bf16.mxu0 0
    %1616 = vmatpush2.bf16.msra.mxu0 0
    %1617 = vmatprep.subr.bf16.mxu0 0
    %1618 = vmatpush2.bf16.msra.mxu0 0
    %1619 = vmatprep.subr.bf16.mxu0 0
    %1620 = vmatpush2.bf16.msra.mxu0 0
    %1621 = vmatprep.subr.bf16.mxu0 0
    %1622 = vmatpush2.bf16.msra.mxu0 0
    %1623 = vmatprep.mubr.bf16.mxu0 0
    %1624 = vmatmul.mubr.bf16.gmra.mxu0 %v1589
    %v1625 = vpop.f32.mrf.mxu0
    %v1626 = vadd.f32 0.0, %v1625
    %v1627 = vpop.f32.mrf.mxu0
    %v1628 = vpop.f32.mrf.mxu0
    %v1629 = vpop.f32.mrf.mxu0
    %1630 = vdwg.mxu0
    %v1631 = vadd.f32 %v1583, %v1626
    %v1632 = vxor.u32 %v1631, 2147483648
    %v1633 = vmul.f32 %v1632, 1.442695
    %v1634 = vpow.pop %v1633
    %v1635 = vadd.f32 %v1634, 1.0
    %v1636 = vrcp.pop %v1635
    %v1637 = vmul.f32 1.0, %v1636
    %v1638 = vtanh.pop %v1631
    %v1639 = vmul.f32 %v1637, %v1576
    %1641 = vrot.lane.b32.xlu0 %v1638, 64
    %v1642 = vpop.permute.xlu0 %1641
    %v1644 = vmul.f32 %v1637, %v1642
    %1646 = vrot.lane.b32.xlu0 %v1644, 32
    %v1647 = vpop.permute.xlu0 %1646
    %v1649 = vadd.f32 %v1639, %v1647
    %v1650 = vtanh.pop %v1649
    %1652 = vrot.lane.b32.xlu0 %v1650, 64
    %v1653 = vpop.permute.xlu0 %1652
    %v1655 = vmul.f32 %v1637, %v1653
    %v1656 = vld [vmem:[%s851] sm:$0x3]
    %v1657 = vpack.c.bf16 %v1655, %v1655
    %1659 = vrot.lane.b32.xlu0 %v1657, 32
    %v1660 = vpop.permute.xlu0 %1659
    %v1662 = vsel %vm296, %v1660, 0
    %1664 = vmatprep.subr.bf16.mxu0 0
    %1665 = vmatpush1.bf16.msra.mxu0 0
    %1666 = vmatprep.subr.bf16.mxu0 0
    %1667 = vmatpush1.bf16.msra.mxu0 0
    %1668 = vmatprep.subr.bf16.mxu0 0
    %1669 = vmatpush1.bf16.msra.mxu0 0
    %1670 = vmatprep.subr.bf16.mxu0 0
    %1671 = vmatpush1.bf16.msra.mxu0 0
    %1672 = vmatprep.subr.bf16.mxu0 0
    %1673 = vmatpush1.bf16.msra.mxu0 0
    %1674 = vmatprep.subr.bf16.mxu0 0
    %1675 = vmatpush1.bf16.msra.mxu0 0
    %1676 = vmatprep.subr.bf16.mxu0 0
    %1677 = vmatpush1.bf16.msra.mxu0 %v1224
    %1678 = vmatprep.subr.bf16.mxu0 0
    %1679 = vmatpush1.bf16.msra.mxu0 %v1223
    %1680 = vmatprep.subr.bf16.mxu0 0
    %1681 = vmatpush2.bf16.msra.mxu0 0
    %1682 = vmatprep.subr.bf16.mxu0 0
    %1683 = vmatpush2.bf16.msra.mxu0 0
    %1684 = vmatprep.subr.bf16.mxu0 0
    %1685 = vmatpush2.bf16.msra.mxu0 0
    %1686 = vmatprep.subr.bf16.mxu0 0
    %1687 = vmatpush2.bf16.msra.mxu0 0
    %1688 = vmatprep.subr.bf16.mxu0 0
    %1689 = vmatpush2.bf16.msra.mxu0 0
    %1690 = vmatprep.subr.bf16.mxu0 0
    %1691 = vmatpush2.bf16.msra.mxu0 0
    %1692 = vmatprep.subr.bf16.mxu0 0
    %1693 = vmatpush2.bf16.msra.mxu0 0
    %1694 = vmatprep.subr.bf16.mxu0 0
    %1695 = vmatpush2.bf16.msra.mxu0 0
    %1696 = vmatprep.mubr.bf16.mxu0 0
    %1697 = vmatmul.mubr.bf16.gmra.mxu0 %v1662
    %v1698 = vpop.f32.mrf.mxu0
    %v1699 = vadd.f32 0.0, %v1698
    %v1700 = vpop.f32.mrf.mxu0
    %v1701 = vpop.f32.mrf.mxu0
    %v1702 = vpop.f32.mrf.mxu0
    %1703 = vdwg.mxu0
    %v1704 = vadd.f32 %v1656, %v1699
    %v1705 = vxor.u32 %v1704, 2147483648
    %v1706 = vmul.f32 %v1705, 1.442695
    %v1707 = vpow.pop %v1706
    %v1708 = vadd.f32 %v1707, 1.0
    %v1709 = vrcp.pop %v1708
    %v1710 = vmul.f32 1.0, %v1709
    %v1711 = vtanh.pop %v1704
    %v1712 = vmul.f32 %v1710, %v1649
    %1714 = vrot.lane.b32.xlu0 %v1711, 64
    %v1715 = vpop.permute.xlu0 %1714
    %v1717 = vmul.f32 %v1710, %v1715
    %1719 = vrot.lane.b32.xlu0 %v1717, 32
    %v1720 = vpop.permute.xlu0 %1719
    %v1722 = vadd.f32 %v1712, %v1720
    %v1723 = vtanh.pop %v1722
    %1725 = vrot.lane.b32.xlu0 %v1723, 64
    %v1726 = vpop.permute.xlu0 %1725
    %v1728 = vmul.f32 %v1710, %v1726
    %v1729 = vld [vmem:[%s944] sm:$0x3]
    %v1730 = vpack.c.bf16 %v1728, %v1728
    %1732 = vrot.lane.b32.xlu0 %v1730, 32
    %v1733 = vpop.permute.xlu0 %1732
    %v1735 = vsel %vm296, %v1733, 0
    %1737 = vmatprep.subr.bf16.mxu0 0
    %1738 = vmatpush1.bf16.msra.mxu0 0
    %1739 = vmatprep.subr.bf16.mxu0 0
    %1740 = vmatpush1.bf16.msra.mxu0 0
    %1741 = vmatprep.subr.bf16.mxu0 0
    %1742 = vmatpush1.bf16.msra.mxu0 0
    %1743 = vmatprep.subr.bf16.mxu0 0
    %1744 = vmatpush1.bf16.msra.mxu0 0
    %1745 = vmatprep.subr.bf16.mxu0 0
    %1746 = vmatpush1.bf16.msra.mxu0 0
    %1747 = vmatprep.subr.bf16.mxu0 0
    %1748 = vmatpush1.bf16.msra.mxu0 0
    %1749 = vmatprep.subr.bf16.mxu0 0
    %1750 = vmatpush1.bf16.msra.mxu0 %v1224
    %1751 = vmatprep.subr.bf16.mxu0 0
    %1752 = vmatpush1.bf16.msra.mxu0 %v1223
    %1753 = vmatprep.subr.bf16.mxu0 0
    %1754 = vmatpush2.bf16.msra.mxu0 0
    %1755 = vmatprep.subr.bf16.mxu0 0
    %1756 = vmatpush2.bf16.msra.mxu0 0
    %1757 = vmatprep.subr.bf16.mxu0 0
    %1758 = vmatpush2.bf16.msra.mxu0 0
    %1759 = vmatprep.subr.bf16.mxu0 0
    %1760 = vmatpush2.bf16.msra.mxu0 0
    %1761 = vmatprep.subr.bf16.mxu0 0
    %1762 = vmatpush2.bf16.msra.mxu0 0
    %1763 = vmatprep.subr.bf16.mxu0 0
    %1764 = vmatpush2.bf16.msra.mxu0 0
    %1765 = vmatprep.subr.bf16.mxu0 0
    %1766 = vmatpush2.bf16.msra.mxu0 0
    %1767 = vmatprep.subr.bf16.mxu0 0
    %1768 = vmatpush2.bf16.msra.mxu0 0
    %1769 = vmatprep.mubr.bf16.mxu0 0
    %1770 = vmatmul.mubr.bf16.gmra.mxu0 %v1735
    %v1771 = vpop.f32.mrf.mxu0
    %v1772 = vadd.f32 0.0, %v1771
    %v1773 = vpop.f32.mrf.mxu0
    %v1774 = vpop.f32.mrf.mxu0
    %v1775 = vpop.f32.mrf.mxu0
    %1776 = vdwg.mxu0
    %v1777 = vadd.f32 %v1729, %v1772
    %v1778 = vxor.u32 %v1777, 2147483648
    %v1779 = vmul.f32 %v1778, 1.442695
    %v1780 = vpow.pop %v1779
    %v1781 = vadd.f32 %v1780, 1.0
    %v1782 = vrcp.pop %v1781
    %v1783 = vmul.f32 1.0, %v1782
    %v1784 = vtanh.pop %v1777
    %v1785 = vmul.f32 %v1783, %v1722
    %1787 = vrot.lane.b32.xlu0 %v1784, 64
    %v1788 = vpop.permute.xlu0 %1787
    %v1790 = vmul.f32 %v1783, %v1788
    %1792 = vrot.lane.b32.xlu0 %v1790, 32
    %v1793 = vpop.permute.xlu0 %1792
    %v1795 = vadd.f32 %v1785, %v1793
    %v1796 = vtanh.pop %v1795
    %1798 = vrot.lane.b32.xlu0 %v1796, 64
    %v1799 = vpop.permute.xlu0 %1798
    %v1801 = vmul.f32 %v1783, %v1799
    %v1802 = vld [vmem:[#allocation10] sm:$0xff]
    %v1803 = vld [vmem:[#allocation10 + $0x8] sm:$0xff]
    %v1804 = vld [vmem:[#allocation10 + $0x10] sm:$0xff]
    %v1805 = vld [vmem:[#allocation10 + $0x18] sm:$0xff]
    %v1806 = vld [vmem:[#allocation12] sm:$0x1]
    %v1808 = vlaneseq
    %v1809 = vshrl.u32 %v1808, 7
    %v1810 = vsub.s32 0, %v1809
    %v1811 = vrot.slane %v1806, %v1810
    %1814 = vrot.lane.b32.xlu0 %v1801, 32
    %v1815 = vpop.permute.xlu0 %1814
    %v1816 = vsel %vm296, %v1815, 0
    %1818 = vmatprep.subr.mxu0 0.0
    %1819 = vmatpush1.msra.mxu0 0.0
    %1820 = vmatprep.subr.mxu0 0.0
    %1821 = vmatpush1.msra.mxu0 0.0
    %1822 = vmatprep.subr.mxu0 0.0
    %1823 = vmatpush1.msra.mxu0 0.0
    %1824 = vmatprep.subr.mxu0 0.0
    %1825 = vmatpush1.msra.mxu0 0.0
    %1826 = vmatprep.subr.mxu0 0.0
    %1827 = vmatpush1.msra.mxu0 0.0
    %1828 = vmatprep.subr.mxu0 0.0
    %1829 = vmatpush1.msra.mxu0 0.0
    %1830 = vmatprep.subr.mxu0 0.0
    %1831 = vmatpush1.msra.mxu0 0.0
    %1832 = vmatprep.subr.mxu0 0.0
    %1833 = vmatpush1.msra.mxu0 0.0
    %1834 = vmatprep.subr.mxu0 0.0
    %1835 = vmatpush1.msra.mxu0 0.0
    %1836 = vmatprep.subr.mxu0 0.0
    %1837 = vmatpush1.msra.mxu0 0.0
    %1838 = vmatprep.subr.mxu0 0.0
    %1839 = vmatpush1.msra.mxu0 0.0
    %1840 = vmatprep.subr.mxu0 0.0
    %1841 = vmatpush1.msra.mxu0 0.0
    %1842 = vmatprep.subr.mxu0 0.0
    %1843 = vmatpush1.msra.mxu0 %v1805
    %1844 = vmatprep.subr.mxu0 0.0
    %1845 = vmatpush1.msra.mxu0 %v1804
    %1846 = vmatprep.subr.mxu0 0.0
    %1847 = vmatpush1.msra.mxu0 %v1803
    %1848 = vmatprep.subr.mxu0 0.0
    %1849 = vmatpush1.msra.mxu0 %v1802
    %1850 = vmatprep.subr.mxu0 0.0
    %1851 = vmatpush2.msra.mxu0 0.0
    %1852 = vmatprep.subr.mxu0 0.0
    %1853 = vmatpush2.msra.mxu0 0.0
    %1854 = vmatprep.subr.mxu0 0.0
    %1855 = vmatpush2.msra.mxu0 0.0
    %1856 = vmatprep.subr.mxu0 0.0
    %1857 = vmatpush2.msra.mxu0 0.0
    %1858 = vmatprep.subr.mxu0 0.0
    %1859 = vmatpush2.msra.mxu0 0.0
    %1860 = vmatprep.subr.mxu0 0.0
    %1861 = vmatpush2.msra.mxu0 0.0
    %1862 = vmatprep.subr.mxu0 0.0
    %1863 = vmatpush2.msra.mxu0 0.0
    %1864 = vmatprep.subr.mxu0 0.0
    %1865 = vmatpush2.msra.mxu0 0.0
    %1866 = vmatprep.subr.mxu0 0.0
    %1867 = vmatpush2.msra.mxu0 0.0
    %1868 = vmatprep.subr.mxu0 0.0
    %1869 = vmatpush2.msra.mxu0 0.0
    %1870 = vmatprep.subr.mxu0 0.0
    %1871 = vmatpush2.msra.mxu0 0.0
    %1872 = vmatprep.subr.mxu0 0.0
    %1873 = vmatpush2.msra.mxu0 0.0
    %1874 = vmatprep.subr.mxu0 0.0
    %1875 = vmatpush2.msra.mxu0 0.0
    %1876 = vmatprep.subr.mxu0 0.0
    %1877 = vmatpush2.msra.mxu0 0.0
    %1878 = vmatprep.subr.mxu0 0.0
    %1879 = vmatpush2.msra.mxu0 0.0
    %1880 = vmatprep.subr.mxu0 0.0
    %1881 = vmatpush2.msra.mxu0 0.0
    %1882 = vmatprep.mubr.f32.mxu0 0.0
    %1883 = vmatmul.mubr.f32.gmra.mxu0 %v1816
    %v1884 = vpop.f32.mrf.mxu0
    %v1885 = vadd.f32 %v1811, %v1884
    %v1886 = vpop.f32.mrf.mxu0
    %1887 = vdwg.mxu0
    %1888 = vst [vmem:[#allocation13] sm:$0x3] %v1885
    // Predicated region
    $region58: #{lstm_model_forward.1} parent=1 // pred_check
      _
    $region59: #{lstm_model_forward.1} parent=1 // pred_check_branch
      %1890 = sbr.rel (0) target = $region61
    $region60: #{lstm_model_forward.1} parent=1 // pred_region
      %s1892 = ssub.s32 32, 32
      %1893 = vsyncadd [#allocation6], %s1892
      %s1895 = sshll.u32 [#allocation13], 4
      %s1896 = int_to_ptr.vmem [resolvable:$true] %s1895
      %1898 = dma.vmem_to_hbm [thread:$0]  %s1896, 32, %s9, [#allocation6]
    $region61: #{lstm_model_forward.1} parent=1 // pred_fallthru
      _
    // Predicated region
    $region62: #{lstm_model_forward.1} parent=1 // pred_check
      _
    $region63: #{lstm_model_forward.1} parent=1 // pred_check_branch
      %1900 = sbr.rel (0) target = $region65
    $region64: #{lstm_model_forward.1} parent=1 // pred_region
      %1901 = dma.done [#allocation6], 32
    $region65: #{lstm_model_forward.1} parent=1 // pred_fallthru
      _
    %1902 = vsyncpa [#allocation5], 1
    %1903 = vsyncpa [#allocation8], 1
    %1904 = vsyncpa [#allocation11], 1
    %1905 = vsyncpa [#allocation6], 1

</llo_original>
